<compile_context>
chip_gen: v5e
topology: v5e:2x2
jax: 0.10.0
libtpu: 0.0.40
codegen_flags: <defaults>
</compile_context>

<pallas_src>
import functools

import jax
import jax.numpy as jnp
from jax import lax
from jax.experimental import pallas as pl
from jax.experimental.pallas import tpu as pltpu

BN_EPS = 1e-5
_TB_MAX = 4096  # batch-tile width (lanes); multiple of 128


def _round_up(n, m):
    return ((n + m - 1) // m) * m


def _swish(z):
    # swish(z) = z * sigmoid(z) = u * (1 + tanh(u)), u = z/2  -> single EUP op
    u = 0.5 * z
    return u * (1.0 + jnp.tanh(u))


def _sigmoid(z):
    # sigmoid(z) = 0.5 * (1 + tanh(z/2))  -> single EUP op
    return 0.5 * (1.0 + jnp.tanh(0.5 * z))


def _bn_coeffs(s1, s2, gamma, beta, inv_n):
    # single-sweep BN: mu = s1/N, var = E[x^2] - mu^2 (biased), gamma/beta folded
    mu = s1 * inv_n
    var = s2 * inv_n - mu * mu
    inv = gamma * lax.rsqrt(var + BN_EPS)
    return inv, beta - mu * inv


def _fc1(w_ref, b_ref, x):
    # x is (TB, 8): contract the feature axis of both operands so the MXU emits
    # (16, TB) directly -- no wrapper-side transpose of x.
    z = lax.dot_general(w_ref[...], x, (((1,), (1,)), ((), ())),
                        preferred_element_type=jnp.float32)
    return _swish(z + b_ref[...])


def _fc(w_ref, b_ref, h):
    z = jnp.dot(w_ref[...], h, preferred_element_type=jnp.float32)
    return _swish(z + b_ref[...])


def _stats_kernel(n_valid, tile_b,
                  x_ref, w1, b1, g1, be1, w2, b2, g2, be2, w3, b3,
                  s1a, s2a, s1b, s2b, s1c, s2c):
    """Phase p (p=0,1,2) accumulates sum / sum-of-squares of the post-swish
    activation feeding BatchNorm layer p+1 (layer p+1 needs layer p's stats)."""
    phase = pl.program_id(0)
    bt = pl.program_id(1)
    inv_n = 1.0 / float(n_valid)

    @pl.when(jnp.logical_and(phase == 0, bt == 0))
    def _init():
        for ref in (s1a, s2a, s1b, s2b, s1c, s2c):
            ref[...] = jnp.zeros_like(ref)

    x = x_ref[...]                                              # (TB, 8)
    lane = lax.broadcasted_iota(jnp.int32, (1, tile_b), 1) + bt * tile_b
    mask = (lane < n_valid).astype(jnp.float32)                 # 0 on padded rows

    def accum(h, s1_ref, s2_ref):
        hm = h * mask
        s1_ref[...] += jnp.sum(hm, axis=-1, keepdims=True)
        s2_ref[...] += jnp.sum(hm * h, axis=-1, keepdims=True)

    h1 = _fc1(w1, b1, x)                                        # (16, TB)

    @pl.when(phase == 0)
    def _p0():
        accum(h1, s1a, s2a)

    @pl.when(phase == 1)
    def _p1():
        iv1, sh1 = _bn_coeffs(s1a[...], s2a[...], g1[...], be1[...], inv_n)
        h2 = _fc(w2, b2, h1 * iv1 + sh1)                        # (8, TB)
        accum(h2, s1b, s2b)

    @pl.when(phase == 2)
    def _p2():
        iv1, sh1 = _bn_coeffs(s1a[...], s2a[...], g1[...], be1[...], inv_n)
        h2 = _fc(w2, b2, h1 * iv1 + sh1)
        iv2, sh2 = _bn_coeffs(s1b[...], s2b[...], g2[...], be2[...], inv_n)
        h3 = _fc(w3, b3, h2 * iv2 + sh2)                        # (4, TB)
        accum(h3, s1c, s2c)


def _apply_kernel(x_ref, w1, b1, iv1, sh1, w2, b2, iv2, sh2,
                  w3, b3, iv3, sh3, w4, b4, o_ref):
    x = x_ref[...]                                              # (TB, 8)
    h = _fc1(w1, b1, x)                                         # (16, TB)
    h = h * iv1[...] + sh1[...]
    h = _fc(w2, b2, h)                                          # (8, TB)
    h = h * iv2[...] + sh2[...]
    h = _fc(w3, b3, h)                                          # (4, TB)
    h = h * iv3[...] + sh3[...]
    z = jnp.dot(w4[...], h, preferred_element_type=jnp.float32) + b4[...]
    o_ref[...] = _sigmoid(z)                                    # lane-dense (1, TB)


def _vmem_limit_bytes():
    try:
        cap = int(pltpu.get_tpu_info().vmem_capacity_bytes)
    except Exception:
        cap = 64 * 2**20  # conservative (v7x-sized) fallback
    return max(32 * 2**20, int(0.75 * cap))


def network_forward(x, params):
    """x: (B, 8) float32. Returns (B, 1) float32 (training-mode BatchNorm)."""
    B, f_in = x.shape
    assert f_in == 8, f_in

    tb = min(_TB_MAX, _round_up(max(B, 1), 128))
    b_pad = _round_up(B, tb)
    nt = b_pad // tb
    if b_pad != B:
        x = jnp.pad(x, ((0, b_pad - B), (0, 0)))  # zero rows; masked out of BN stats

    vmem_limit = _vmem_limit_bytes()

    w1, b1, g1, be1 = params["w1"], params["b1"], params["g1"], params["be1"]
    w2, b2, g2, be2 = params["w2"], params["b2"], params["g2"], params["be2"]
    w3, b3, g3, be3 = params["w3"], params["b3"], params["g3"], params["be3"]
    w4, b4 = params["w4"], params["b4"]

    def const_spec(shape, n_grid_axes):
        zero = (0,) * len(shape)
        if n_grid_axes == 1:
            return pl.BlockSpec(shape, lambda b: zero)
        return pl.BlockSpec(shape, lambda p, b: zero)

    # ---- pass 1: per-layer batch statistics (resident accumulators) ----
    stat_shapes = ((16, 1), (16, 1), (8, 1), (8, 1), (4, 1), (4, 1))
    small_ins = (w1, b1, g1, be1, w2, b2, g2, be2, w3, b3)
    stats = pl.pallas_call(
        functools.partial(_stats_kernel, B, tb),
        grid=(3, nt),
        in_specs=[pl.BlockSpec((tb, 8), lambda p, b: (b, 0))]
        + [const_spec(a.shape, 2) for a in small_ins],
        out_specs=tuple(const_spec(s, 2) for s in stat_shapes),
        out_shape=tuple(jax.ShapeDtypeStruct(s, jnp.float32) for s in stat_shapes),
        compiler_params=pltpu.CompilerParams(
            dimension_semantics=("arbitrary", "arbitrary"),
            vmem_limit_bytes=vmem_limit),
    )(x, *small_ins)
    s1a, s2a, s1b, s2b, s1c, s2c = stats

    # tiny per-feature coefficient folding (<= 16 elements per tensor)
    inv_n = 1.0 / float(B)
    iv1, sh1 = _bn_coeffs(s1a, s2a, g1, be1, inv_n)
    iv2, sh2 = _bn_coeffs(s1b, s2b, g2, be2, inv_n)
    iv3, sh3 = _bn_coeffs(s1c, s2c, g3, be3, inv_n)

    # ---- pass 2: normalize + full forward, batch axis parallel (megacore) ----
    apply_small = (w1, b1, iv1, sh1, w2, b2, iv2, sh2, w3, b3, iv3, sh3, w4, b4)
    out = pl.pallas_call(
        _apply_kernel,
        grid=(nt,),
        in_specs=[pl.BlockSpec((tb, 8), lambda b: (b, 0))]
        + [const_spec(a.shape, 1) for a in apply_small],
        out_specs=pl.BlockSpec((1, tb), lambda b: (0, b)),
        out_shape=jax.ShapeDtypeStruct((1, b_pad), jnp.float32),
        compiler_params=pltpu.CompilerParams(
            dimension_semantics=("parallel",),
            vmem_limit_bytes=vmem_limit),
    )(x, *apply_small)

    return out.reshape(b_pad, 1)[:B]  # lane-dense (1, B_pad) -> (B, 1)


def init_params(key):
    """PyTorch-style init: Linear W,b ~ U(-1/sqrt(in), 1/sqrt(in)); BN gamma=1,
    beta=0. Weights (out, in); biases / BN params as (out, 1) column vectors."""
    dims = [(8, 16), (16, 8), (8, 4), (4, 1)]
    params = {}
    keys = jax.random.split(key, 2 * len(dims))
    for i, (fin, fout) in enumerate(dims):
        bound = 1.0 / jnp.sqrt(jnp.float32(fin))
        params[f"w{i+1}"] = jax.random.uniform(
            keys[2 * i], (fout, fin), jnp.float32, -bound, bound)
        params[f"b{i+1}"] = jax.random.uniform(
            keys[2 * i + 1], (fout, 1), jnp.float32, -bound, bound)
        if i < 3:  # BN follows fc1..fc3 only
            params[f"g{i+1}"] = jnp.ones((fout, 1), jnp.float32)
            params[f"be{i+1}"] = jnp.zeros((fout, 1), jnp.float32)
    return params


def network_ref(x, params):
    """Pure-JAX reference (standard (B, F) layout) for correctness checking."""
    def swish(z):
        return z * jax.nn.sigmoid(z)

    def bn(z, g, b):
        mu = jnp.mean(z, axis=0, keepdims=True)
        var = jnp.mean((z - mu) ** 2, axis=0, keepdims=True)
        return g.T * (z - mu) / jnp.sqrt(var + BN_EPS) + b.T

    h = swish(x @ params["w1"].T + params["b1"].T)
    h = bn(h, params["g1"], params["be1"])
    h = swish(h @ params["w2"].T + params["b2"].T)
    h = bn(h, params["g2"], params["be2"])
    h = swish(h @ params["w3"].T + params["b3"].T)
    h = bn(h, params["g3"], params["be3"])
    return jax.nn.sigmoid(h @ params["w4"].T + params["b4"].T)


if __name__ == "__main__":
    key = jax.random.PRNGKey(0)
    k_params, k_x = jax.random.split(key)

    params = init_params(k_params)
    x = jax.random.normal(k_x, (8, 8), jnp.float32)  # batch=8, features=8

    out = jax.jit(network_forward)(x, params)
    jax.block_until_ready(out)

    ref = network_ref(x, params)
    assert out.shape == (8, 1), out.shape
    err = float(jnp.max(jnp.abs(out - ref)))
    assert jnp.allclose(out, ref, atol=1e-4, rtol=1e-4), (err, out, ref)

    print("KERNEL_OK")
</pallas_src>

<mosaic_0001>
module attributes {stable_mosaic.version = 11 : i64} {
  func.func @_stats_kernel(%arg0: i32, %arg1: i32, %arg2: memref<128x8xf32, #tpu.memory_space<vmem>>, %arg3: memref<16x8xf32, #tpu.memory_space<vmem>>, %arg4: memref<16x1xf32, #tpu.memory_space<vmem>>, %arg5: memref<16x1xf32, #tpu.memory_space<vmem>>, %arg6: memref<16x1xf32, #tpu.memory_space<vmem>>, %arg7: memref<8x16xf32, #tpu.memory_space<vmem>>, %arg8: memref<8x1xf32, #tpu.memory_space<vmem>>, %arg9: memref<8x1xf32, #tpu.memory_space<vmem>>, %arg10: memref<8x1xf32, #tpu.memory_space<vmem>>, %arg11: memref<4x8xf32, #tpu.memory_space<vmem>>, %arg12: memref<4x1xf32, #tpu.memory_space<vmem>>, %arg13: memref<16x1xf32, #tpu.memory_space<vmem>>, %arg14: memref<16x1xf32, #tpu.memory_space<vmem>>, %arg15: memref<8x1xf32, #tpu.memory_space<vmem>>, %arg16: memref<8x1xf32, #tpu.memory_space<vmem>>, %arg17: memref<4x1xf32, #tpu.memory_space<vmem>>, %arg18: memref<4x1xf32, #tpu.memory_space<vmem>>) attributes {dimension_semantics = [#tpu.dimension_semantics<arbitrary>, #tpu.dimension_semantics<arbitrary>], iteration_bounds = array<i64: 3, 1>, scalar_prefetch = 0 : i64, scratch_operands = 0 : i64, tpu.core_type = #tpu.core_type<tc>, window_params = [{transform_indices = @transform_0, window_bounds = array<i64: 128, 8>}, {pipeline_mode = #tpu.pipeline_mode<synchronous>, transform_indices = @transform_1, window_bounds = array<i64: 16, 8>}, {pipeline_mode = #tpu.pipeline_mode<synchronous>, transform_indices = @transform_2, window_bounds = array<i64: 16, 1>}, {pipeline_mode = #tpu.pipeline_mode<synchronous>, transform_indices = @transform_3, window_bounds = array<i64: 16, 1>}, {pipeline_mode = #tpu.pipeline_mode<synchronous>, transform_indices = @transform_4, window_bounds = array<i64: 16, 1>}, {pipeline_mode = #tpu.pipeline_mode<synchronous>, transform_indices = @transform_5, window_bounds = array<i64: 8, 16>}, {pipeline_mode = #tpu.pipeline_mode<synchronous>, transform_indices = @transform_6, window_bounds = array<i64: 8, 1>}, {pipeline_mode = #tpu.pipeline_mode<synchronous>, transform_indices = @transform_7, window_bounds = array<i64: 8, 1>}, {pipeline_mode = #tpu.pipeline_mode<synchronous>, transform_indices = @transform_8, window_bounds = array<i64: 8, 1>}, {pipeline_mode = #tpu.pipeline_mode<synchronous>, transform_indices = @transform_9, window_bounds = array<i64: 4, 8>}, {pipeline_mode = #tpu.pipeline_mode<synchronous>, transform_indices = @transform_10, window_bounds = array<i64: 4, 1>}, {pipeline_mode = #tpu.pipeline_mode<synchronous>, transform_indices = @transform_11, window_bounds = array<i64: 16, 1>}, {pipeline_mode = #tpu.pipeline_mode<synchronous>, transform_indices = @transform_12, window_bounds = array<i64: 16, 1>}, {pipeline_mode = #tpu.pipeline_mode<synchronous>, transform_indices = @transform_13, window_bounds = array<i64: 8, 1>}, {pipeline_mode = #tpu.pipeline_mode<synchronous>, transform_indices = @transform_14, window_bounds = array<i64: 8, 1>}, {pipeline_mode = #tpu.pipeline_mode<synchronous>, transform_indices = @transform_15, window_bounds = array<i64: 4, 1>}, {pipeline_mode = #tpu.pipeline_mode<synchronous>, transform_indices = @transform_16, window_bounds = array<i64: 4, 1>}]} {
    %c0_i32 = arith.constant 0 : i32
    %0 = arith.cmpi eq, %arg0, %c0_i32 : i32
    %c0_i32_0 = arith.constant 0 : i32
    %1 = arith.cmpi eq, %arg1, %c0_i32_0 : i32
    %2 = arith.andi %0, %1 : i1
    %3 = arith.extui %2 : i1 to i32
    %c0_i32_1 = arith.constant 0 : i32
    %4 = arith.cmpi ne, %3, %c0_i32_1 : i32
    scf.if %4 {
      %cst_13 = arith.constant 0.000000e+00 : f32
      %34 = vector.broadcast %cst_13 : f32 to vector<16x1xf32>
      %c0_14 = arith.constant 0 : index
      %c0_15 = arith.constant 0 : index
      %35 = vector.load %arg13[%c0_14, %c0_15] : memref<16x1xf32, #tpu.memory_space<vmem>>, vector<16x1xf32>
      tpu.vector_store %arg13[%c0_14, %c0_15], %34 {strides = array<i32>} : memref<16x1xf32, #tpu.memory_space<vmem>>, vector<16x1xf32>,
      %cst_16 = arith.constant 0.000000e+00 : f32
      %36 = vector.broadcast %cst_16 : f32 to vector<16x1xf32>
      %c0_17 = arith.constant 0 : index
      %c0_18 = arith.constant 0 : index
      %37 = vector.load %arg14[%c0_17, %c0_18] : memref<16x1xf32, #tpu.memory_space<vmem>>, vector<16x1xf32>
      tpu.vector_store %arg14[%c0_17, %c0_18], %36 {strides = array<i32>} : memref<16x1xf32, #tpu.memory_space<vmem>>, vector<16x1xf32>,
      %cst_19 = arith.constant 0.000000e+00 : f32
      %38 = vector.broadcast %cst_19 : f32 to vector<8x1xf32>
      %c0_20 = arith.constant 0 : index
      %c0_21 = arith.constant 0 : index
      %39 = vector.load %arg15[%c0_20, %c0_21] : memref<8x1xf32, #tpu.memory_space<vmem>>, vector<8x1xf32>
      tpu.vector_store %arg15[%c0_20, %c0_21], %38 {strides = array<i32>} : memref<8x1xf32, #tpu.memory_space<vmem>>, vector<8x1xf32>,
      %cst_22 = arith.constant 0.000000e+00 : f32
      %40 = vector.broadcast %cst_22 : f32 to vector<8x1xf32>
      %c0_23 = arith.constant 0 : index
      %c0_24 = arith.constant 0 : index
      %41 = vector.load %arg16[%c0_23, %c0_24] : memref<8x1xf32, #tpu.memory_space<vmem>>, vector<8x1xf32>
      tpu.vector_store %arg16[%c0_23, %c0_24], %40 {strides = array<i32>} : memref<8x1xf32, #tpu.memory_space<vmem>>, vector<8x1xf32>,
      %cst_25 = arith.constant 0.000000e+00 : f32
      %42 = vector.broadcast %cst_25 : f32 to vector<4x1xf32>
      %c0_26 = arith.constant 0 : index
      %c0_27 = arith.constant 0 : index
      %43 = vector.load %arg17[%c0_26, %c0_27] : memref<4x1xf32, #tpu.memory_space<vmem>>, vector<4x1xf32>
      tpu.vector_store %arg17[%c0_26, %c0_27], %42 {strides = array<i32>} : memref<4x1xf32, #tpu.memory_space<vmem>>, vector<4x1xf32>,
      %cst_28 = arith.constant 0.000000e+00 : f32
      %44 = vector.broadcast %cst_28 : f32 to vector<4x1xf32>
      %c0_29 = arith.constant 0 : index
      %c0_30 = arith.constant 0 : index
      %45 = vector.load %arg18[%c0_29, %c0_30] : memref<4x1xf32, #tpu.memory_space<vmem>>, vector<4x1xf32>
      tpu.vector_store %arg18[%c0_29, %c0_30], %44 {strides = array<i32>} : memref<4x1xf32, #tpu.memory_space<vmem>>, vector<4x1xf32>,
    } else {
    }
    %c0 = arith.constant 0 : index
    %c0_2 = arith.constant 0 : index
    %5 = vector.load %arg2[%c0, %c0_2] : memref<128x8xf32, #tpu.memory_space<vmem>>, vector<128x8xf32>
    %6 = tpu.iota {dimensions = array<i32: 1>} : vector<1x128xi32>
    %c128_i32 = arith.constant 128 : i32
    %7 = arith.muli %arg1, %c128_i32 : i32
    %8 = vector.broadcast %7 : i32 to vector<1x128xi32>
    %9 = arith.addi %6, %8 : vector<1x128xi32>
    %c8_i32 = arith.constant 8 : i32
    %10 = vector.broadcast %c8_i32 : i32 to vector<1x128xi32>
    %11 = arith.cmpi slt, %9, %10 : vector<1x128xi32>
    %12 = arith.extui %11 : vector<1x128xi1> to vector<1x128xi32>
    %13 = arith.sitofp %12 : vector<1x128xi32> to vector<1x128xf32>
    %c0_3 = arith.constant 0 : index
    %c0_4 = arith.constant 0 : index
    %14 = vector.load %arg3[%c0_3, %c0_4] : memref<16x8xf32, #tpu.memory_space<vmem>>, vector<16x8xf32>
    %cst = arith.constant dense<0.000000e+00> : vector<16x128xf32>
    %15 = tpu.matmul %14, %5, %cst {dimension_numbers = #tpu.dot_dimension_numbers<[1], [1], [0], [0], [0, 0, 1, 0], [], []>} : vector<16x8xf32>, vector<128x8xf32>, vector<16x128xf32> -> vector<16x128xf32>
    %c0_5 = arith.constant 0 : index
    %c0_6 = arith.constant 0 : index
    %16 = vector.load %arg4[%c0_5, %c0_6] : memref<16x1xf32, #tpu.memory_space<vmem>>, vector<16x1xf32>
    %17 = vector.broadcast %16 : vector<16x1xf32> to vector<16x128xf32>
    %18 = arith.addf %15, %17 : vector<16x128xf32>
    %cst_7 = arith.constant 5.000000e-01 : f32
    %19 = vector.broadcast %cst_7 : f32 to vector<16x128xf32>
    %20 = arith.mulf %19, %18 : vector<16x128xf32>
    %21 = math.tanh %20 : vector<16x128xf32>
    %cst_8 = arith.constant 1.000000e+00 : f32
    %22 = vector.broadcast %cst_8 : f32 to vector<16x128xf32>
    %23 = arith.addf %22, %21 : vector<16x128xf32>
    %24 = arith.mulf %20, %23 : vector<16x128xf32>
    %c0_i32_9 = arith.constant 0 : i32
    %25 = arith.cmpi eq, %arg0, %c0_i32_9 : i32
    %26 = arith.extui %25 : i1 to i32
    %c0_i32_10 = arith.constant 0 : i32
    %27 = arith.cmpi ne, %26, %c0_i32_10 : i32
    scf.if %27 {
      %34 = vector.broadcast %13 : vector<1x128xf32> to vector<16x128xf32>
      %35 = arith.mulf %24, %34 : vector<16x128xf32>
      %c0_13 = arith.constant 0 : index
      %c0_14 = arith.constant 0 : index
      %36 = vector.load %arg13[%c0_13, %c0_14] : memref<16x1xf32, #tpu.memory_space<vmem>>, vector<16x1xf32>
      %cst_15 = arith.constant dense<0.000000e+00> : vector<16xf32>
      %37 = vector.multi_reduction <add>, %35, %cst_15 [1] : vector<16x128xf32> to vector<16xf32>
      %38 = vector.shape_cast %37 : vector<16xf32> to vector<16x1xf32>
      %39 = arith.addf %36, %38 : vector<16x1xf32>
      %c0_16 = arith.constant 0 : index
      %c0_17 = arith.constant 0 : index
      %40 = vector.load %arg13[%c0_16, %c0_17] : memref<16x1xf32, #tpu.memory_space<vmem>>, vector<16x1xf32>
      tpu.vector_store %arg13[%c0_16, %c0_17], %39 {strides = array<i32>} : memref<16x1xf32, #tpu.memory_space<vmem>>, vector<16x1xf32>,
      %c0_18 = arith.constant 0 : index
      %c0_19 = arith.constant 0 : index
      %41 = vector.load %arg14[%c0_18, %c0_19] : memref<16x1xf32, #tpu.memory_space<vmem>>, vector<16x1xf32>
      %42 = arith.mulf %35, %24 : vector<16x128xf32>
      %cst_20 = arith.constant dense<0.000000e+00> : vector<16xf32>
      %43 = vector.multi_reduction <add>, %42, %cst_20 [1] : vector<16x128xf32> to vector<16xf32>
      %44 = vector.shape_cast %43 : vector<16xf32> to vector<16x1xf32>
      %45 = arith.addf %41, %44 : vector<16x1xf32>
      %c0_21 = arith.constant 0 : index
      %c0_22 = arith.constant 0 : index
      %46 = vector.load %arg14[%c0_21, %c0_22] : memref<16x1xf32, #tpu.memory_space<vmem>>, vector<16x1xf32>
      tpu.vector_store %arg14[%c0_21, %c0_22], %45 {strides = array<i32>} : memref<16x1xf32, #tpu.memory_space<vmem>>, vector<16x1xf32>,
    } else {
    }
    %c1_i32 = arith.constant 1 : i32
    %28 = arith.cmpi eq, %arg0, %c1_i32 : i32
    %29 = arith.extui %28 : i1 to i32
    %c0_i32_11 = arith.constant 0 : i32
    %30 = arith.cmpi ne, %29, %c0_i32_11 : i32
    scf.if %30 {
      %c0_13 = arith.constant 0 : index
      %c0_14 = arith.constant 0 : index
      %34 = vector.load %arg13[%c0_13, %c0_14] : memref<16x1xf32, #tpu.memory_space<vmem>>, vector<16x1xf32>
      %c0_15 = arith.constant 0 : index
      %c0_16 = arith.constant 0 : index
      %35 = vector.load %arg14[%c0_15, %c0_16] : memref<16x1xf32, #tpu.memory_space<vmem>>, vector<16x1xf32>
      %c0_17 = arith.constant 0 : index
      %c0_18 = arith.constant 0 : index
      %36 = vector.load %arg5[%c0_17, %c0_18] : memref<16x1xf32, #tpu.memory_space<vmem>>, vector<16x1xf32>
      %c0_19 = arith.constant 0 : index
      %c0_20 = arith.constant 0 : index
      %37 = vector.load %arg6[%c0_19, %c0_20] : memref<16x1xf32, #tpu.memory_space<vmem>>, vector<16x1xf32>
      %cst_21 = arith.constant 1.250000e-01 : f32
      %38 = vector.broadcast %cst_21 : f32 to vector<16x1xf32>
      %39 = arith.mulf %34, %38 : vector<16x1xf32>
      %cst_22 = arith.constant 1.250000e-01 : f32
      %40 = vector.broadcast %cst_22 : f32 to vector<16x1xf32>
      %41 = arith.mulf %35, %40 : vector<16x1xf32>
      %42 = arith.mulf %39, %39 : vector<16x1xf32>
      %43 = arith.subf %41, %42 : vector<16x1xf32>
      %cst_23 = arith.constant 9.99999974E-6 : f32
      %44 = vector.broadcast %cst_23 : f32 to vector<16x1xf32>
      %45 = arith.addf %43, %44 : vector<16x1xf32>
      %46 = math.rsqrt %45 : vector<16x1xf32>
      %47 = arith.mulf %36, %46 : vector<16x1xf32>
      %48 = arith.mulf %39, %47 : vector<16x1xf32>
      %49 = arith.subf %37, %48 : vector<16x1xf32>
      %50 = vector.broadcast %47 : vector<16x1xf32> to vector<16x128xf32>
      %51 = arith.mulf %24, %50 : vector<16x128xf32>
      %52 = vector.broadcast %49 : vector<16x1xf32> to vector<16x128xf32>
      %53 = arith.addf %51, %52 : vector<16x128xf32>
      %c0_24 = arith.constant 0 : index
      %c0_25 = arith.constant 0 : index
      %54 = vector.load %arg7[%c0_24, %c0_25] : memref<8x16xf32, #tpu.memory_space<vmem>>, vector<8x16xf32>
      %cst_26 = arith.constant dense<0.000000e+00> : vector<8x128xf32>
      %55 = tpu.matmul %54, %53, %cst_26 {dimension_numbers = #tpu.dot_dimension_numbers<[1], [0], [0], [1], [0, 0, 1, 1], [], []>} : vector<8x16xf32>, vector<16x128xf32>, vector<8x128xf32> -> vector<8x128xf32>
      %c0_27 = arith.constant 0 : index
      %c0_28 = arith.constant 0 : index
      %56 = vector.load %arg8[%c0_27, %c0_28] : memref<8x1xf32, #tpu.memory_space<vmem>>, vector<8x1xf32>
      %57 = vector.broadcast %56 : vector<8x1xf32> to vector<8x128xf32>
      %58 = arith.addf %55, %57 : vector<8x128xf32>
      %cst_29 = arith.constant 5.000000e-01 : f32
      %59 = vector.broadcast %cst_29 : f32 to vector<8x128xf32>
      %60 = arith.mulf %59, %58 : vector<8x128xf32>
      %61 = math.tanh %60 : vector<8x128xf32>
      %cst_30 = arith.constant 1.000000e+00 : f32
      %62 = vector.broadcast %cst_30 : f32 to vector<8x128xf32>
      %63 = arith.addf %62, %61 : vector<8x128xf32>
      %64 = arith.mulf %60, %63 : vector<8x128xf32>
      %65 = vector.broadcast %13 : vector<1x128xf32> to vector<8x128xf32>
      %66 = arith.mulf %64, %65 : vector<8x128xf32>
      %c0_31 = arith.constant 0 : index
      %c0_32 = arith.constant 0 : index
      %67 = vector.load %arg15[%c0_31, %c0_32] : memref<8x1xf32, #tpu.memory_space<vmem>>, vector<8x1xf32>
      %cst_33 = arith.constant dense<0.000000e+00> : vector<8xf32>
      %68 = vector.multi_reduction <add>, %66, %cst_33 [1] : vector<8x128xf32> to vector<8xf32>
      %69 = vector.shape_cast %68 : vector<8xf32> to vector<8x1xf32>
      %70 = arith.addf %67, %69 : vector<8x1xf32>
      %c0_34 = arith.constant 0 : index
      %c0_35 = arith.constant 0 : index
      %71 = vector.load %arg15[%c0_34, %c0_35] : memref<8x1xf32, #tpu.memory_space<vmem>>, vector<8x1xf32>
      tpu.vector_store %arg15[%c0_34, %c0_35], %70 {strides = array<i32>} : memref<8x1xf32, #tpu.memory_space<vmem>>, vector<8x1xf32>,
      %c0_36 = arith.constant 0 : index
      %c0_37 = arith.constant 0 : index
      %72 = vector.load %arg16[%c0_36, %c0_37] : memref<8x1xf32, #tpu.memory_space<vmem>>, vector<8x1xf32>
      %73 = arith.mulf %66, %64 : vector<8x128xf32>
      %cst_38 = arith.constant dense<0.000000e+00> : vector<8xf32>
      %74 = vector.multi_reduction <add>, %73, %cst_38 [1] : vector<8x128xf32> to vector<8xf32>
      %75 = vector.shape_cast %74 : vector<8xf32> to vector<8x1xf32>
      %76 = arith.addf %72, %75 : vector<8x1xf32>
      %c0_39 = arith.constant 0 : index
      %c0_40 = arith.constant 0 : index
      %77 = vector.load %arg16[%c0_39, %c0_40] : memref<8x1xf32, #tpu.memory_space<vmem>>, vector<8x1xf32>
      tpu.vector_store %arg16[%c0_39, %c0_40], %76 {strides = array<i32>} : memref<8x1xf32, #tpu.memory_space<vmem>>, vector<8x1xf32>,
    } else {
    }
    %c2_i32 = arith.constant 2 : i32
    %31 = arith.cmpi eq, %arg0, %c2_i32 : i32
    %32 = arith.extui %31 : i1 to i32
    %c0_i32_12 = arith.constant 0 : i32
    %33 = arith.cmpi ne, %32, %c0_i32_12 : i32
    scf.if %33 {
      %c0_13 = arith.constant 0 : index
      %c0_14 = arith.constant 0 : index
      %34 = vector.load %arg13[%c0_13, %c0_14] : memref<16x1xf32, #tpu.memory_space<vmem>>, vector<16x1xf32>
      %c0_15 = arith.constant 0 : index
      %c0_16 = arith.constant 0 : index
      %35 = vector.load %arg14[%c0_15, %c0_16] : memref<16x1xf32, #tpu.memory_space<vmem>>, vector<16x1xf32>
      %c0_17 = arith.constant 0 : index
      %c0_18 = arith.constant 0 : index
      %36 = vector.load %arg5[%c0_17, %c0_18] : memref<16x1xf32, #tpu.memory_space<vmem>>, vector<16x1xf32>
      %c0_19 = arith.constant 0 : index
      %c0_20 = arith.constant 0 : index
      %37 = vector.load %arg6[%c0_19, %c0_20] : memref<16x1xf32, #tpu.memory_space<vmem>>, vector<16x1xf32>
      %cst_21 = arith.constant 1.250000e-01 : f32
      %38 = vector.broadcast %cst_21 : f32 to vector<16x1xf32>
      %39 = arith.mulf %34, %38 : vector<16x1xf32>
      %cst_22 = arith.constant 1.250000e-01 : f32
      %40 = vector.broadcast %cst_22 : f32 to vector<16x1xf32>
      %41 = arith.mulf %35, %40 : vector<16x1xf32>
      %42 = arith.mulf %39, %39 : vector<16x1xf32>
      %43 = arith.subf %41, %42 : vector<16x1xf32>
      %cst_23 = arith.constant 9.99999974E-6 : f32
      %44 = vector.broadcast %cst_23 : f32 to vector<16x1xf32>
      %45 = arith.addf %43, %44 : vector<16x1xf32>
      %46 = math.rsqrt %45 : vector<16x1xf32>
      %47 = arith.mulf %36, %46 : vector<16x1xf32>
      %48 = arith.mulf %39, %47 : vector<16x1xf32>
      %49 = arith.subf %37, %48 : vector<16x1xf32>
      %50 = vector.broadcast %47 : vector<16x1xf32> to vector<16x128xf32>
      %51 = arith.mulf %24, %50 : vector<16x128xf32>
      %52 = vector.broadcast %49 : vector<16x1xf32> to vector<16x128xf32>
      %53 = arith.addf %51, %52 : vector<16x128xf32>
      %c0_24 = arith.constant 0 : index
      %c0_25 = arith.constant 0 : index
      %54 = vector.load %arg7[%c0_24, %c0_25] : memref<8x16xf32, #tpu.memory_space<vmem>>, vector<8x16xf32>
      %cst_26 = arith.constant dense<0.000000e+00> : vector<8x128xf32>
      %55 = tpu.matmul %54, %53, %cst_26 {dimension_numbers = #tpu.dot_dimension_numbers<[1], [0], [0], [1], [0, 0, 1, 1], [], []>} : vector<8x16xf32>, vector<16x128xf32>, vector<8x128xf32> -> vector<8x128xf32>
      %c0_27 = arith.constant 0 : index
      %c0_28 = arith.constant 0 : index
      %56 = vector.load %arg8[%c0_27, %c0_28] : memref<8x1xf32, #tpu.memory_space<vmem>>, vector<8x1xf32>
      %57 = vector.broadcast %56 : vector<8x1xf32> to vector<8x128xf32>
      %58 = arith.addf %55, %57 : vector<8x128xf32>
      %cst_29 = arith.constant 5.000000e-01 : f32
      %59 = vector.broadcast %cst_29 : f32 to vector<8x128xf32>
      %60 = arith.mulf %59, %58 : vector<8x128xf32>
      %61 = math.tanh %60 : vector<8x128xf32>
      %cst_30 = arith.constant 1.000000e+00 : f32
      %62 = vector.broadcast %cst_30 : f32 to vector<8x128xf32>
      %63 = arith.addf %62, %61 : vector<8x128xf32>
      %64 = arith.mulf %60, %63 : vector<8x128xf32>
      %c0_31 = arith.constant 0 : index
      %c0_32 = arith.constant 0 : index
      %65 = vector.load %arg15[%c0_31, %c0_32] : memref<8x1xf32, #tpu.memory_space<vmem>>, vector<8x1xf32>
      %c0_33 = arith.constant 0 : index
      %c0_34 = arith.constant 0 : index
      %66 = vector.load %arg16[%c0_33, %c0_34] : memref<8x1xf32, #tpu.memory_space<vmem>>, vector<8x1xf32>
      %c0_35 = arith.constant 0 : index
      %c0_36 = arith.constant 0 : index
      %67 = vector.load %arg9[%c0_35, %c0_36] : memref<8x1xf32, #tpu.memory_space<vmem>>, vector<8x1xf32>
      %c0_37 = arith.constant 0 : index
      %c0_38 = arith.constant 0 : index
      %68 = vector.load %arg10[%c0_37, %c0_38] : memref<8x1xf32, #tpu.memory_space<vmem>>, vector<8x1xf32>
      %cst_39 = arith.constant 1.250000e-01 : f32
      %69 = vector.broadcast %cst_39 : f32 to vector<8x1xf32>
      %70 = arith.mulf %65, %69 : vector<8x1xf32>
      %cst_40 = arith.constant 1.250000e-01 : f32
      %71 = vector.broadcast %cst_40 : f32 to vector<8x1xf32>
      %72 = arith.mulf %66, %71 : vector<8x1xf32>
      %73 = arith.mulf %70, %70 : vector<8x1xf32>
      %74 = arith.subf %72, %73 : vector<8x1xf32>
      %cst_41 = arith.constant 9.99999974E-6 : f32
      %75 = vector.broadcast %cst_41 : f32 to vector<8x1xf32>
      %76 = arith.addf %74, %75 : vector<8x1xf32>
      %77 = math.rsqrt %76 : vector<8x1xf32>
      %78 = arith.mulf %67, %77 : vector<8x1xf32>
      %79 = arith.mulf %70, %78 : vector<8x1xf32>
      %80 = arith.subf %68, %79 : vector<8x1xf32>
      %81 = vector.broadcast %78 : vector<8x1xf32> to vector<8x128xf32>
      %82 = arith.mulf %64, %81 : vector<8x128xf32>
      %83 = vector.broadcast %80 : vector<8x1xf32> to vector<8x128xf32>
      %84 = arith.addf %82, %83 : vector<8x128xf32>
      %c0_42 = arith.constant 0 : index
      %c0_43 = arith.constant 0 : index
      %85 = vector.load %arg11[%c0_42, %c0_43] : memref<4x8xf32, #tpu.memory_space<vmem>>, vector<4x8xf32>
      %cst_44 = arith.constant dense<0.000000e+00> : vector<4x128xf32>
      %86 = tpu.matmul %85, %84, %cst_44 {dimension_numbers = #tpu.dot_dimension_numbers<[1], [0], [0], [1], [0, 0, 1, 1], [], []>} : vector<4x8xf32>, vector<8x128xf32>, vector<4x128xf32> -> vector<4x128xf32>
      %c0_45 = arith.constant 0 : index
      %c0_46 = arith.constant 0 : index
      %87 = vector.load %arg12[%c0_45, %c0_46] : memref<4x1xf32, #tpu.memory_space<vmem>>, vector<4x1xf32>
      %88 = vector.broadcast %87 : vector<4x1xf32> to vector<4x128xf32>
      %89 = arith.addf %86, %88 : vector<4x128xf32>
      %cst_47 = arith.constant 5.000000e-01 : f32
      %90 = vector.broadcast %cst_47 : f32 to vector<4x128xf32>
      %91 = arith.mulf %90, %89 : vector<4x128xf32>
      %92 = math.tanh %91 : vector<4x128xf32>
      %cst_48 = arith.constant 1.000000e+00 : f32
      %93 = vector.broadcast %cst_48 : f32 to vector<4x128xf32>
      %94 = arith.addf %93, %92 : vector<4x128xf32>
      %95 = arith.mulf %91, %94 : vector<4x128xf32>
      %96 = vector.broadcast %13 : vector<1x128xf32> to vector<4x128xf32>
      %97 = arith.mulf %95, %96 : vector<4x128xf32>
      %c0_49 = arith.constant 0 : index
      %c0_50 = arith.constant 0 : index
      %98 = vector.load %arg17[%c0_49, %c0_50] : memref<4x1xf32, #tpu.memory_space<vmem>>, vector<4x1xf32>
      %cst_51 = arith.constant dense<0.000000e+00> : vector<4xf32>
      %99 = vector.multi_reduction <add>, %97, %cst_51 [1] : vector<4x128xf32> to vector<4xf32>
      %100 = vector.shape_cast %99 : vector<4xf32> to vector<4x1xf32>
      %101 = arith.addf %98, %100 : vector<4x1xf32>
      %c0_52 = arith.constant 0 : index
      %c0_53 = arith.constant 0 : index
      %102 = vector.load %arg17[%c0_52, %c0_53] : memref<4x1xf32, #tpu.memory_space<vmem>>, vector<4x1xf32>
      tpu.vector_store %arg17[%c0_52, %c0_53], %101 {strides = array<i32>} : memref<4x1xf32, #tpu.memory_space<vmem>>, vector<4x1xf32>,
      %c0_54 = arith.constant 0 : index
      %c0_55 = arith.constant 0 : index
      %103 = vector.load %arg18[%c0_54, %c0_55] : memref<4x1xf32, #tpu.memory_space<vmem>>, vector<4x1xf32>
      %104 = arith.mulf %97, %95 : vector<4x128xf32>
      %cst_56 = arith.constant dense<0.000000e+00> : vector<4xf32>
      %105 = vector.multi_reduction <add>, %104, %cst_56 [1] : vector<4x128xf32> to vector<4xf32>
      %106 = vector.shape_cast %105 : vector<4xf32> to vector<4x1xf32>
      %107 = arith.addf %103, %106 : vector<4x1xf32>
      %c0_57 = arith.constant 0 : index
      %c0_58 = arith.constant 0 : index
      %108 = vector.load %arg18[%c0_57, %c0_58] : memref<4x1xf32, #tpu.memory_space<vmem>>, vector<4x1xf32>
      tpu.vector_store %arg18[%c0_57, %c0_58], %107 {strides = array<i32>} : memref<4x1xf32, #tpu.memory_space<vmem>>, vector<4x1xf32>,
    } else {
    }
    return
  }
  func.func @transform_0(%arg0: i32, %arg1: i32) -> (i32, i32) {
    %c0_i32 = arith.constant 0 : i32
    %c0_i32_0 = arith.constant 0 : i32
    return %arg1, %c0_i32 : i32, i32
  }
  func.func @transform_1(%arg0: i32, %arg1: i32) -> (i32, i32) {
    %c0_i32 = arith.constant 0 : i32
    %c0_i32_0 = arith.constant 0 : i32
    %c0_i32_1 = arith.constant 0 : i32
    return %c0_i32, %c0_i32_0 : i32, i32
  }
  func.func @transform_2(%arg0: i32, %arg1: i32) -> (i32, i32) {
    %c0_i32 = arith.constant 0 : i32
    %c0_i32_0 = arith.constant 0 : i32
    %c0_i32_1 = arith.constant 0 : i32
    return %c0_i32, %c0_i32_0 : i32, i32
  }
  func.func @transform_3(%arg0: i32, %arg1: i32) -> (i32, i32) {
    %c0_i32 = arith.constant 0 : i32
    %c0_i32_0 = arith.constant 0 : i32
    %c0_i32_1 = arith.constant 0 : i32
    return %c0_i32, %c0_i32_0 : i32, i32
  }
  func.func @transform_4(%arg0: i32, %arg1: i32) -> (i32, i32) {
    %c0_i32 = arith.constant 0 : i32
    %c0_i32_0 = arith.constant 0 : i32
    %c0_i32_1 = arith.constant 0 : i32
    return %c0_i32, %c0_i32_0 : i32, i32
  }
  func.func @transform_5(%arg0: i32, %arg1: i32) -> (i32, i32) {
    %c0_i32 = arith.constant 0 : i32
    %c0_i32_0 = arith.constant 0 : i32
    %c0_i32_1 = arith.constant 0 : i32
    return %c0_i32, %c0_i32_0 : i32, i32
  }
  func.func @transform_6(%arg0: i32, %arg1: i32) -> (i32, i32) {
    %c0_i32 = arith.constant 0 : i32
    %c0_i32_0 = arith.constant 0 : i32
    %c0_i32_1 = arith.constant 0 : i32
    return %c0_i32, %c0_i32_0 : i32, i32
  }
  func.func @transform_7(%arg0: i32, %arg1: i32) -> (i32, i32) {
    %c0_i32 = arith.constant 0 : i32
    %c0_i32_0 = arith.constant 0 : i32
    %c0_i32_1 = arith.constant 0 : i32
    return %c0_i32, %c0_i32_0 : i32, i32
  }
  func.func @transform_8(%arg0: i32, %arg1: i32) -> (i32, i32) {
    %c0_i32 = arith.constant 0 : i32
    %c0_i32_0 = arith.constant 0 : i32
    %c0_i32_1 = arith.constant 0 : i32
    return %c0_i32, %c0_i32_0 : i32, i32
  }
  func.func @transform_9(%arg0: i32, %arg1: i32) -> (i32, i32) {
    %c0_i32 = arith.constant 0 : i32
    %c0_i32_0 = arith.constant 0 : i32
    %c0_i32_1 = arith.constant 0 : i32
    return %c0_i32, %c0_i32_0 : i32, i32
  }
  func.func @transform_10(%arg0: i32, %arg1: i32) -> (i32, i32) {
    %c0_i32 = arith.constant 0 : i32
    %c0_i32_0 = arith.constant 0 : i32
    %c0_i32_1 = arith.constant 0 : i32
    return %c0_i32, %c0_i32_0 : i32, i32
  }
  func.func @transform_11(%arg0: i32, %arg1: i32) -> (i32, i32) {
    %c0_i32 = arith.constant 0 : i32
    %c0_i32_0 = arith.constant 0 : i32
    %c0_i32_1 = arith.constant 0 : i32
    return %c0_i32, %c0_i32_0 : i32, i32
  }
  func.func @transform_12(%arg0: i32, %arg1: i32) -> (i32, i32) {
    %c0_i32 = arith.constant 0 : i32
    %c0_i32_0 = arith.constant 0 : i32
    %c0_i32_1 = arith.constant 0 : i32
    return %c0_i32, %c0_i32_0 : i32, i32
  }
  func.func @transform_13(%arg0: i32, %arg1: i32) -> (i32, i32) {
    %c0_i32 = arith.constant 0 : i32
    %c0_i32_0 = arith.constant 0 : i32
    %c0_i32_1 = arith.constant 0 : i32
    return %c0_i32, %c0_i32_0 : i32, i32
  }
  func.func @transform_14(%arg0: i32, %arg1: i32) -> (i32, i32) {
    %c0_i32 = arith.constant 0 : i32
    %c0_i32_0 = arith.constant 0 : i32
    %c0_i32_1 = arith.constant 0 : i32
    return %c0_i32, %c0_i32_0 : i32, i32
  }
  func.func @transform_15(%arg0: i32, %arg1: i32) -> (i32, i32) {
    %c0_i32 = arith.constant 0 : i32
    %c0_i32_0 = arith.constant 0 : i32
    %c0_i32_1 = arith.constant 0 : i32
    return %c0_i32, %c0_i32_0 : i32, i32
  }
  func.func @transform_16(%arg0: i32, %arg1: i32) -> (i32, i32) {
    %c0_i32 = arith.constant 0 : i32
    %c0_i32_0 = arith.constant 0 : i32
    %c0_i32_1 = arith.constant 0 : i32
    return %c0_i32, %c0_i32_0 : i32, i32
  }
}

module attributes {stable_mosaic.version = 11 : i64} {
  func.func @_apply_kernel(%arg0: i32, %arg1: memref<128x8xf32, #tpu.memory_space<vmem>>, %arg2: memref<16x8xf32, #tpu.memory_space<vmem>>, %arg3: memref<16x1xf32, #tpu.memory_space<vmem>>, %arg4: memref<16x1xf32, #tpu.memory_space<vmem>>, %arg5: memref<16x1xf32, #tpu.memory_space<vmem>>, %arg6: memref<8x16xf32, #tpu.memory_space<vmem>>, %arg7: memref<8x1xf32, #tpu.memory_space<vmem>>, %arg8: memref<8x1xf32, #tpu.memory_space<vmem>>, %arg9: memref<8x1xf32, #tpu.memory_space<vmem>>, %arg10: memref<4x8xf32, #tpu.memory_space<vmem>>, %arg11: memref<4x1xf32, #tpu.memory_space<vmem>>, %arg12: memref<4x1xf32, #tpu.memory_space<vmem>>, %arg13: memref<4x1xf32, #tpu.memory_space<vmem>>, %arg14: memref<1x4xf32, #tpu.memory_space<vmem>>, %arg15: memref<1x1xf32, #tpu.memory_space<vmem>>, %arg16: memref<1x128xf32, #tpu.memory_space<vmem>>) attributes {dimension_semantics = [#tpu.dimension_semantics<parallel>], iteration_bounds = array<i64: 1>, scalar_prefetch = 0 : i64, scratch_operands = 0 : i64, tpu.core_type = #tpu.core_type<tc>, window_params = [{transform_indices = @transform_0, window_bounds = array<i64: 128, 8>}, {pipeline_mode = #tpu.pipeline_mode<synchronous>, transform_indices = @transform_1, window_bounds = array<i64: 16, 8>}, {pipeline_mode = #tpu.pipeline_mode<synchronous>, transform_indices = @transform_2, window_bounds = array<i64: 16, 1>}, {pipeline_mode = #tpu.pipeline_mode<synchronous>, transform_indices = @transform_3, window_bounds = array<i64: 16, 1>}, {pipeline_mode = #tpu.pipeline_mode<synchronous>, transform_indices = @transform_4, window_bounds = array<i64: 16, 1>}, {pipeline_mode = #tpu.pipeline_mode<synchronous>, transform_indices = @transform_5, window_bounds = array<i64: 8, 16>}, {pipeline_mode = #tpu.pipeline_mode<synchronous>, transform_indices = @transform_6, window_bounds = array<i64: 8, 1>}, {pipeline_mode = #tpu.pipeline_mode<synchronous>, transform_indices = @transform_7, window_bounds = array<i64: 8, 1>}, {pipeline_mode = #tpu.pipeline_mode<synchronous>, transform_indices = @transform_8, window_bounds = array<i64: 8, 1>}, {pipeline_mode = #tpu.pipeline_mode<synchronous>, transform_indices = @transform_9, window_bounds = array<i64: 4, 8>}, {pipeline_mode = #tpu.pipeline_mode<synchronous>, transform_indices = @transform_10, window_bounds = array<i64: 4, 1>}, {pipeline_mode = #tpu.pipeline_mode<synchronous>, transform_indices = @transform_11, window_bounds = array<i64: 4, 1>}, {pipeline_mode = #tpu.pipeline_mode<synchronous>, transform_indices = @transform_12, window_bounds = array<i64: 4, 1>}, {pipeline_mode = #tpu.pipeline_mode<synchronous>, transform_indices = @transform_13, window_bounds = array<i64: 1, 4>}, {pipeline_mode = #tpu.pipeline_mode<synchronous>, transform_indices = @transform_14, window_bounds = array<i64: 1, 1>}, {transform_indices = @transform_15, window_bounds = array<i64: 1, 128>}]} {
    %c0 = arith.constant 0 : index
    %c0_0 = arith.constant 0 : index
    %0 = vector.load %arg1[%c0, %c0_0] : memref<128x8xf32, #tpu.memory_space<vmem>>, vector<128x8xf32>
    %c0_1 = arith.constant 0 : index
    %c0_2 = arith.constant 0 : index
    %1 = vector.load %arg2[%c0_1, %c0_2] : memref<16x8xf32, #tpu.memory_space<vmem>>, vector<16x8xf32>
    %cst = arith.constant dense<0.000000e+00> : vector<16x128xf32>
    %2 = tpu.matmul %1, %0, %cst {dimension_numbers = #tpu.dot_dimension_numbers<[1], [1], [0], [0], [0, 0, 1, 0], [], []>} : vector<16x8xf32>, vector<128x8xf32>, vector<16x128xf32> -> vector<16x128xf32>
    %c0_3 = arith.constant 0 : index
    %c0_4 = arith.constant 0 : index
    %3 = vector.load %arg3[%c0_3, %c0_4] : memref<16x1xf32, #tpu.memory_space<vmem>>, vector<16x1xf32>
    %4 = vector.broadcast %3 : vector<16x1xf32> to vector<16x128xf32>
    %5 = arith.addf %2, %4 : vector<16x128xf32>
    %cst_5 = arith.constant 5.000000e-01 : f32
    %6 = vector.broadcast %cst_5 : f32 to vector<16x128xf32>
    %7 = arith.mulf %6, %5 : vector<16x128xf32>
    %8 = math.tanh %7 : vector<16x128xf32>
    %cst_6 = arith.constant 1.000000e+00 : f32
    %9 = vector.broadcast %cst_6 : f32 to vector<16x128xf32>
    %10 = arith.addf %9, %8 : vector<16x128xf32>
    %11 = arith.mulf %7, %10 : vector<16x128xf32>
    %c0_7 = arith.constant 0 : index
    %c0_8 = arith.constant 0 : index
    %12 = vector.load %arg4[%c0_7, %c0_8] : memref<16x1xf32, #tpu.memory_space<vmem>>, vector<16x1xf32>
    %13 = vector.broadcast %12 : vector<16x1xf32> to vector<16x128xf32>
    %14 = arith.mulf %11, %13 : vector<16x128xf32>
    %c0_9 = arith.constant 0 : index
    %c0_10 = arith.constant 0 : index
    %15 = vector.load %arg5[%c0_9, %c0_10] : memref<16x1xf32, #tpu.memory_space<vmem>>, vector<16x1xf32>
    %16 = vector.broadcast %15 : vector<16x1xf32> to vector<16x128xf32>
    %17 = arith.addf %14, %16 : vector<16x128xf32>
    %c0_11 = arith.constant 0 : index
    %c0_12 = arith.constant 0 : index
    %18 = vector.load %arg6[%c0_11, %c0_12] : memref<8x16xf32, #tpu.memory_space<vmem>>, vector<8x16xf32>
    %cst_13 = arith.constant dense<0.000000e+00> : vector<8x128xf32>
    %19 = tpu.matmul %18, %17, %cst_13 {dimension_numbers = #tpu.dot_dimension_numbers<[1], [0], [0], [1], [0, 0, 1, 1], [], []>} : vector<8x16xf32>, vector<16x128xf32>, vector<8x128xf32> -> vector<8x128xf32>
    %c0_14 = arith.constant 0 : index
    %c0_15 = arith.constant 0 : index
    %20 = vector.load %arg7[%c0_14, %c0_15] : memref<8x1xf32, #tpu.memory_space<vmem>>, vector<8x1xf32>
    %21 = vector.broadcast %20 : vector<8x1xf32> to vector<8x128xf32>
    %22 = arith.addf %19, %21 : vector<8x128xf32>
    %cst_16 = arith.constant 5.000000e-01 : f32
    %23 = vector.broadcast %cst_16 : f32 to vector<8x128xf32>
    %24 = arith.mulf %23, %22 : vector<8x128xf32>
    %25 = math.tanh %24 : vector<8x128xf32>
    %cst_17 = arith.constant 1.000000e+00 : f32
    %26 = vector.broadcast %cst_17 : f32 to vector<8x128xf32>
    %27 = arith.addf %26, %25 : vector<8x128xf32>
    %28 = arith.mulf %24, %27 : vector<8x128xf32>
    %c0_18 = arith.constant 0 : index
    %c0_19 = arith.constant 0 : index
    %29 = vector.load %arg8[%c0_18, %c0_19] : memref<8x1xf32, #tpu.memory_space<vmem>>, vector<8x1xf32>
    %30 = vector.broadcast %29 : vector<8x1xf32> to vector<8x128xf32>
    %31 = arith.mulf %28, %30 : vector<8x128xf32>
    %c0_20 = arith.constant 0 : index
    %c0_21 = arith.constant 0 : index
    %32 = vector.load %arg9[%c0_20, %c0_21] : memref<8x1xf32, #tpu.memory_space<vmem>>, vector<8x1xf32>
    %33 = vector.broadcast %32 : vector<8x1xf32> to vector<8x128xf32>
    %34 = arith.addf %31, %33 : vector<8x128xf32>
    %c0_22 = arith.constant 0 : index
    %c0_23 = arith.constant 0 : index
    %35 = vector.load %arg10[%c0_22, %c0_23] : memref<4x8xf32, #tpu.memory_space<vmem>>, vector<4x8xf32>
    %cst_24 = arith.constant dense<0.000000e+00> : vector<4x128xf32>
    %36 = tpu.matmul %35, %34, %cst_24 {dimension_numbers = #tpu.dot_dimension_numbers<[1], [0], [0], [1], [0, 0, 1, 1], [], []>} : vector<4x8xf32>, vector<8x128xf32>, vector<4x128xf32> -> vector<4x128xf32>
    %c0_25 = arith.constant 0 : index
    %c0_26 = arith.constant 0 : index
    %37 = vector.load %arg11[%c0_25, %c0_26] : memref<4x1xf32, #tpu.memory_space<vmem>>, vector<4x1xf32>
    %38 = vector.broadcast %37 : vector<4x1xf32> to vector<4x128xf32>
    %39 = arith.addf %36, %38 : vector<4x128xf32>
    %cst_27 = arith.constant 5.000000e-01 : f32
    %40 = vector.broadcast %cst_27 : f32 to vector<4x128xf32>
    %41 = arith.mulf %40, %39 : vector<4x128xf32>
    %42 = math.tanh %41 : vector<4x128xf32>
    %cst_28 = arith.constant 1.000000e+00 : f32
    %43 = vector.broadcast %cst_28 : f32 to vector<4x128xf32>
    %44 = arith.addf %43, %42 : vector<4x128xf32>
    %45 = arith.mulf %41, %44 : vector<4x128xf32>
    %c0_29 = arith.constant 0 : index
    %c0_30 = arith.constant 0 : index
    %46 = vector.load %arg12[%c0_29, %c0_30] : memref<4x1xf32, #tpu.memory_space<vmem>>, vector<4x1xf32>
    %47 = vector.broadcast %46 : vector<4x1xf32> to vector<4x128xf32>
    %48 = arith.mulf %45, %47 : vector<4x128xf32>
    %c0_31 = arith.constant 0 : index
    %c0_32 = arith.constant 0 : index
    %49 = vector.load %arg13[%c0_31, %c0_32] : memref<4x1xf32, #tpu.memory_space<vmem>>, vector<4x1xf32>
    %50 = vector.broadcast %49 : vector<4x1xf32> to vector<4x128xf32>
    %51 = arith.addf %48, %50 : vector<4x128xf32>
    %c0_33 = arith.constant 0 : index
    %c0_34 = arith.constant 0 : index
    %52 = vector.load %arg14[%c0_33, %c0_34] : memref<1x4xf32, #tpu.memory_space<vmem>>, vector<1x4xf32>
    %cst_35 = arith.constant dense<0.000000e+00> : vector<1x128xf32>
    %53 = tpu.matmul %52, %51, %cst_35 {dimension_numbers = #tpu.dot_dimension_numbers<[1], [0], [0], [1], [0, 0, 1, 1], [], []>} : vector<1x4xf32>, vector<4x128xf32>, vector<1x128xf32> -> vector<1x128xf32>
    %c0_36 = arith.constant 0 : index
    %c0_37 = arith.constant 0 : index
    %54 = vector.load %arg15[%c0_36, %c0_37] : memref<1x1xf32, #tpu.memory_space<vmem>>, vector<1x1xf32>
    %55 = vector.broadcast %54 : vector<1x1xf32> to vector<1x128xf32>
    %56 = arith.addf %53, %55 : vector<1x128xf32>
    %cst_38 = arith.constant 5.000000e-01 : f32
    %57 = vector.broadcast %cst_38 : f32 to vector<1x128xf32>
    %58 = arith.mulf %57, %56 : vector<1x128xf32>
    %59 = math.tanh %58 : vector<1x128xf32>
    %cst_39 = arith.constant 1.000000e+00 : f32
    %60 = vector.broadcast %cst_39 : f32 to vector<1x128xf32>
    %61 = arith.addf %60, %59 : vector<1x128xf32>
    %cst_40 = arith.constant 5.000000e-01 : f32
    %62 = vector.broadcast %cst_40 : f32 to vector<1x128xf32>
    %63 = arith.mulf %62, %61 : vector<1x128xf32>
    %c0_41 = arith.constant 0 : index
    %c0_42 = arith.constant 0 : index
    %64 = vector.load %arg16[%c0_41, %c0_42] : memref<1x128xf32, #tpu.memory_space<vmem>>, vector<1x128xf32>
    tpu.vector_store %arg16[%c0_41, %c0_42], %63 {strides = array<i32>} : memref<1x128xf32, #tpu.memory_space<vmem>>, vector<1x128xf32>,
    return
  }
  func.func @transform_0(%arg0: i32) -> (i32, i32) {
    %c0_i32 = arith.constant 0 : i32
    %c0_i32_0 = arith.constant 0 : i32
    return %arg0, %c0_i32 : i32, i32
  }
  func.func @transform_1(%arg0: i32) -> (i32, i32) {
    %c0_i32 = arith.constant 0 : i32
    %c0_i32_0 = arith.constant 0 : i32
    %c0_i32_1 = arith.constant 0 : i32
    return %c0_i32, %c0_i32_0 : i32, i32
  }
  func.func @transform_2(%arg0: i32) -> (i32, i32) {
    %c0_i32 = arith.constant 0 : i32
    %c0_i32_0 = arith.constant 0 : i32
    %c0_i32_1 = arith.constant 0 : i32
    return %c0_i32, %c0_i32_0 : i32, i32
  }
  func.func @transform_3(%arg0: i32) -> (i32, i32) {
    %c0_i32 = arith.constant 0 : i32
    %c0_i32_0 = arith.constant 0 : i32
    %c0_i32_1 = arith.constant 0 : i32
    return %c0_i32, %c0_i32_0 : i32, i32
  }
  func.func @transform_4(%arg0: i32) -> (i32, i32) {
    %c0_i32 = arith.constant 0 : i32
    %c0_i32_0 = arith.constant 0 : i32
    %c0_i32_1 = arith.constant 0 : i32
    return %c0_i32, %c0_i32_0 : i32, i32
  }
  func.func @transform_5(%arg0: i32) -> (i32, i32) {
    %c0_i32 = arith.constant 0 : i32
    %c0_i32_0 = arith.constant 0 : i32
    %c0_i32_1 = arith.constant 0 : i32
    return %c0_i32, %c0_i32_0 : i32, i32
  }
  func.func @transform_6(%arg0: i32) -> (i32, i32) {
    %c0_i32 = arith.constant 0 : i32
    %c0_i32_0 = arith.constant 0 : i32
    %c0_i32_1 = arith.constant 0 : i32
    return %c0_i32, %c0_i32_0 : i32, i32
  }
  func.func @transform_7(%arg0: i32) -> (i32, i32) {
    %c0_i32 = arith.constant 0 : i32
    %c0_i32_0 = arith.constant 0 : i32
    %c0_i32_1 = arith.constant 0 : i32
    return %c0_i32, %c0_i32_0 : i32, i32
  }
  func.func @transform_8(%arg0: i32) -> (i32, i32) {
    %c0_i32 = arith.constant 0 : i32
    %c0_i32_0 = arith.constant 0 : i32
    %c0_i32_1 = arith.constant 0 : i32
    return %c0_i32, %c0_i32_0 : i32, i32
  }
  func.func @transform_9(%arg0: i32) -> (i32, i32) {
    %c0_i32 = arith.constant 0 : i32
    %c0_i32_0 = arith.constant 0 : i32
    %c0_i32_1 = arith.constant 0 : i32
    return %c0_i32, %c0_i32_0 : i32, i32
  }
  func.func @transform_10(%arg0: i32) -> (i32, i32) {
    %c0_i32 = arith.constant 0 : i32
    %c0_i32_0 = arith.constant 0 : i32
    %c0_i32_1 = arith.constant 0 : i32
    return %c0_i32, %c0_i32_0 : i32, i32
  }
  func.func @transform_11(%arg0: i32) -> (i32, i32) {
    %c0_i32 = arith.constant 0 : i32
    %c0_i32_0 = arith.constant 0 : i32
    %c0_i32_1 = arith.constant 0 : i32
    return %c0_i32, %c0_i32_0 : i32, i32
  }
  func.func @transform_12(%arg0: i32) -> (i32, i32) {
    %c0_i32 = arith.constant 0 : i32
    %c0_i32_0 = arith.constant 0 : i32
    %c0_i32_1 = arith.constant 0 : i32
    return %c0_i32, %c0_i32_0 : i32, i32
  }
  func.func @transform_13(%arg0: i32) -> (i32, i32) {
    %c0_i32 = arith.constant 0 : i32
    %c0_i32_0 = arith.constant 0 : i32
    %c0_i32_1 = arith.constant 0 : i32
    return %c0_i32, %c0_i32_0 : i32, i32
  }
  func.func @transform_14(%arg0: i32) -> (i32, i32) {
    %c0_i32 = arith.constant 0 : i32
    %c0_i32_0 = arith.constant 0 : i32
    %c0_i32_1 = arith.constant 0 : i32
    return %c0_i32, %c0_i32_0 : i32, i32
  }
  func.func @transform_15(%arg0: i32) -> (i32, i32) {
    %c0_i32 = arith.constant 0 : i32
    %c0_i32_0 = arith.constant 0 : i32
    return %c0_i32, %arg0 : i32, i32
  }
}

</mosaic_0001>

<llo_original>
// kernel: network_forward.3
$region0: #{network_forward.3}
  #allocation0 [shape = 'u32[]', space=smem, size = 0x4, offset = 0x4, fixed_abs, tag = 'smem constant byte address 0x4 - core index']
  #allocation1 [shape = 'u32[72,128]{1,0:T(1,128)}', space=vmem, size = 0x9000, scoped, tag = 'internal scratch']
  #allocation2 [shape = 'f32[1,1]{1,0:T(1,128)S(1)}', space=vmem, size = 0x200, scoped, tag = 'scoped memory for network_forward.3']
  %s0 = inlined_call_operand.vmem [shape: f32[128,8], index: 0, kind: input, shape index: {}]
  %s1 = inlined_call_operand.vmem [shape: f32[16,8], index: 1, kind: input, shape index: {}]
  %s2 = inlined_call_operand.vmem [shape: f32[16,1], index: 2, kind: input, shape index: {}]
  %s3 = inlined_call_operand.vmem [shape: f32[16,1], index: 3, kind: input, shape index: {}]
  %s4 = inlined_call_operand.vmem [shape: f32[16,1], index: 4, kind: input, shape index: {}]
  %s5 = inlined_call_operand.vmem [shape: f32[8,16], index: 5, kind: input, shape index: {}]
  %s6 = inlined_call_operand.vmem [shape: f32[8,1], index: 6, kind: input, shape index: {}]
  %s7 = inlined_call_operand.vmem [shape: f32[8,1], index: 7, kind: input, shape index: {}]
  %s8 = inlined_call_operand.vmem [shape: f32[8,1], index: 8, kind: input, shape index: {}]
  %s9 = inlined_call_operand.vmem [shape: f32[4,8], index: 9, kind: input, shape index: {}]
  %s10 = inlined_call_operand.vmem [shape: f32[4,1], index: 10, kind: input, shape index: {}]
  %s11 = inlined_call_operand.vmem [shape: f32[4,1], index: 11, kind: input, shape index: {}]
  %s12 = inlined_call_operand.vmem [shape: f32[4,1], index: 12, kind: input, shape index: {}]
  %s13 = inlined_call_operand.vmem [shape: f32[1,4], index: 13, kind: input, shape index: {}]
  %s14 = inlined_call_operand.<no memory space> [shape: f32[1,1], index: 14, kind: input, shape index: {}]
  %s15 = inlined_call_operand.vmem [shape: f32[1,128], index: 15, kind: output, shape index: {}]
  %s16 = sld [smem:[#allocation0]]
  $region70: #{network_forward.3} parent=0
    _
  %s18 = ssub.s32 1, %s16
  %s19 = scalar_select 0, %s18, %s16
  %v20 = vstv %s14
  %21 = vst [vmem:[#allocation2] sm:$0x1] %v20
  // Predicated region
  $region2: #{network_forward.3} parent=0 // pred_check
    _
  $region3: #{network_forward.3} parent=0 // pred_check_branch
    %23 = sbr.rel (0) target = $region5
  $region4: #{network_forward.3} parent=0 // pred_region
    _
  $region5: #{network_forward.3} parent=0 // pred_fallthru
    _
  // Predicated region
  $region6: #{network_forward.3} parent=0 // pred_check
    _
  $region7: #{network_forward.3} parent=0 // pred_check_branch
    %25 = sbr.rel (0) target = $region9
  $region8: #{network_forward.3} parent=0 // pred_region
    _
  $region9: #{network_forward.3} parent=0 // pred_fallthru
    _
  // Predicated region
  $region10: #{network_forward.3} parent=0 // pred_check
    _
  $region11: #{network_forward.3} parent=0 // pred_check_branch
    %27 = sbr.rel (0) target = $region13
  $region12: #{network_forward.3} parent=0 // pred_region
    _
  $region13: #{network_forward.3} parent=0 // pred_fallthru
    _
  // Predicated region
  $region14: #{network_forward.3} parent=0 // pred_check
    _
  $region15: #{network_forward.3} parent=0 // pred_check_branch
    %29 = sbr.rel (0) target = $region17
  $region16: #{network_forward.3} parent=0 // pred_region
    _
  $region17: #{network_forward.3} parent=0 // pred_fallthru
    _
  // Predicated region
  $region18: #{network_forward.3} parent=0 // pred_check
    _
  $region19: #{network_forward.3} parent=0 // pred_check_branch
    %31 = sbr.rel (0) target = $region21
  $region20: #{network_forward.3} parent=0 // pred_region
    _
  $region21: #{network_forward.3} parent=0 // pred_fallthru
    _
  // Predicated region
  $region22: #{network_forward.3} parent=0 // pred_check
    _
  $region23: #{network_forward.3} parent=0 // pred_check_branch
    %33 = sbr.rel (0) target = $region25
  $region24: #{network_forward.3} parent=0 // pred_region
    _
  $region25: #{network_forward.3} parent=0 // pred_fallthru
    _
  // Predicated region
  $region26: #{network_forward.3} parent=0 // pred_check
    _
  $region27: #{network_forward.3} parent=0 // pred_check_branch
    %35 = sbr.rel (0) target = $region29
  $region28: #{network_forward.3} parent=0 // pred_region
    _
  $region29: #{network_forward.3} parent=0 // pred_fallthru
    _
  // Predicated region
  $region30: #{network_forward.3} parent=0 // pred_check
    _
  $region31: #{network_forward.3} parent=0 // pred_check_branch
    %37 = sbr.rel (0) target = $region33
  $region32: #{network_forward.3} parent=0 // pred_region
    _
  $region33: #{network_forward.3} parent=0 // pred_fallthru
    _
  // Predicated region
  $region34: #{network_forward.3} parent=0 // pred_check
    _
  $region35: #{network_forward.3} parent=0 // pred_check_branch
    %39 = sbr.rel (0) target = $region37
  $region36: #{network_forward.3} parent=0 // pred_region
    _
  $region37: #{network_forward.3} parent=0 // pred_fallthru
    _
  // Predicated region
  $region38: #{network_forward.3} parent=0 // pred_check
    _
  $region39: #{network_forward.3} parent=0 // pred_check_branch
    %41 = sbr.rel (0) target = $region41
  $region40: #{network_forward.3} parent=0 // pred_region
    _
  $region41: #{network_forward.3} parent=0 // pred_fallthru
    _
  // Predicated region
  $region42: #{network_forward.3} parent=0 // pred_check
    _
  $region43: #{network_forward.3} parent=0 // pred_check_branch
    %43 = sbr.rel (0) target = $region45
  $region44: #{network_forward.3} parent=0 // pred_region
    _
  $region45: #{network_forward.3} parent=0 // pred_fallthru
    _
  // Predicated region
  $region46: #{network_forward.3} parent=0 // pred_check
    _
  $region47: #{network_forward.3} parent=0 // pred_check_branch
    %45 = sbr.rel (0) target = $region49
  $region48: #{network_forward.3} parent=0 // pred_region
    _
  $region49: #{network_forward.3} parent=0 // pred_fallthru
    _
  // Predicated region
  $region50: #{network_forward.3} parent=0 // pred_check
    _
  $region51: #{network_forward.3} parent=0 // pred_check_branch
    %47 = sbr.rel (0) target = $region53
  $region52: #{network_forward.3} parent=0 // pred_region
    _
  $region53: #{network_forward.3} parent=0 // pred_fallthru
    _
  // Predicated region
  $region54: #{network_forward.3} parent=0 // pred_check
    _
  $region55: #{network_forward.3} parent=0 // pred_check_branch
    %49 = sbr.rel (0) target = $region57
  $region56: #{network_forward.3} parent=0 // pred_region
    _
  $region57: #{network_forward.3} parent=0 // pred_fallthru
    _
  // Predicated region
  $region58: #{network_forward.3} parent=0 // pred_check
    _
  $region59: #{network_forward.3} parent=0 // pred_check_branch
    %51 = sbr.rel (0) target = $region61
  $region60: #{network_forward.3} parent=0 // pred_region
    _
  $region61: #{network_forward.3} parent=0 // pred_fallthru
    _
  %v52 = vld [vmem:[%s0] sm:$0xff]
  %v53 = vld [vmem:[%s0 + $0x8] sm:$0xff]
  %v54 = vld [vmem:[%s0 + $0x10] sm:$0xff]
  %v55 = vld [vmem:[%s0 + $0x18] sm:$0xff]
  %v56 = vld [vmem:[%s0 + $0x20] sm:$0xff]
  %v57 = vld [vmem:[%s0 + $0x28] sm:$0xff]
  %v58 = vld [vmem:[%s0 + $0x30] sm:$0xff]
  %v59 = vld [vmem:[%s0 + $0x38] sm:$0xff]
  %v60 = vld [vmem:[%s0 + $0x40] sm:$0xff]
  %v61 = vld [vmem:[%s0 + $0x48] sm:$0xff]
  %v62 = vld [vmem:[%s0 + $0x50] sm:$0xff]
  %v63 = vld [vmem:[%s0 + $0x58] sm:$0xff]
  %v64 = vld [vmem:[%s0 + $0x60] sm:$0xff]
  %v65 = vld [vmem:[%s0 + $0x68] sm:$0xff]
  %v66 = vld [vmem:[%s0 + $0x70] sm:$0xff]
  %v67 = vld [vmem:[%s0 + $0x78] sm:$0xff]
  %v68 = vld [vmem:[%s1] sm:$0xff]
  %v69 = vld [vmem:[%s1 + $0x8] sm:$0xff]
  %v70 = vld [vmem:[%s2] sm:$0xff]
  %v71 = vld [vmem:[%s2 + $0x8] sm:$0xff]
  %73 = vset.pattern.permute.xlu0 0
  %74 = vperm.xlu0 %73, %v70
  %v75 = vpop.permute.xlu0 %74
  %78 = vset.pattern.permute.xlu0 0
  %79 = vperm.xlu0 %78, %v71
  %v80 = vpop.permute.xlu0 %79
  %vm82 = vcmask 64512
  %v84 = vsel %vm82, %v68, 0
  %v87 = vsel %vm82, %v69, 0
  %v90 = vsel %vm82, %v52, 0
  %v93 = vsel %vm82, %v53, 0
  %v96 = vsel %vm82, %v54, 0
  %v99 = vsel %vm82, %v55, 0
  %v102 = vsel %vm82, %v56, 0
  %v105 = vsel %vm82, %v57, 0
  %v108 = vsel %vm82, %v58, 0
  %v111 = vsel %vm82, %v59, 0
  %v114 = vsel %vm82, %v60, 0
  %v117 = vsel %vm82, %v61, 0
  %v120 = vsel %vm82, %v62, 0
  %v123 = vsel %vm82, %v63, 0
  %v126 = vsel %vm82, %v64, 0
  %v129 = vsel %vm82, %v65, 0
  %v132 = vsel %vm82, %v66, 0
  %v135 = vsel %vm82, %v67, 0
  %137 = vmatpush.xpose.msra.mxu0 %v135
  %138 = vmatpush.xpose.msra.mxu0 %v132
  %139 = vmatpush.xpose.msra.mxu0 %v129
  %140 = vmatpush.xpose.msra.mxu0 %v126
  %141 = vmatpush.xpose.msra.mxu0 %v123
  %142 = vmatpush.xpose.msra.mxu0 %v120
  %143 = vmatpush.xpose.msra.mxu0 %v117
  %144 = vmatpush.xpose.msra.mxu0 %v114
  %145 = vmatpush.xpose.msra.mxu0 %v111
  %146 = vmatpush.xpose.msra.mxu0 %v108
  %147 = vmatpush.xpose.msra.mxu0 %v105
  %148 = vmatpush.xpose.msra.mxu0 %v102
  %149 = vmatpush.xpose.msra.mxu0 %v99
  %150 = vmatpush.xpose.msra.mxu0 %v96
  %151 = vmatpush.xpose.msra.mxu0 %v93
  %152 = vmatpush.xpose.msra.mxu0 %v90
  %153 = vmatmul.f32.gmra.mxu0 %v84
  %v154 = vpop.f32.mrf.mxu0
  %v155 = vadd.f32 %v75, %v154
  %156 = vmatmul.f32.gmra.mxu0 %v87
  %v157 = vpop.f32.mrf.mxu0
  %v158 = vadd.f32 %v80, %v157
  %159 = vdwg.mxu0
  %v160 = vmul.f32 %v155, 0.5
  %v161 = vmul.f32 %v158, 0.5
  %v162 = vtanh.pop %v160
  %v163 = vtanh.pop %v161
  %v164 = vadd.f32 %v162, 1.0
  %v165 = vadd.f32 %v163, 1.0
  %v166 = vmul.f32 %v160, %v164
  %v167 = vmul.f32 %v161, %v165
  %v168 = vld [vmem:[%s3] sm:$0xff]
  %v169 = vld [vmem:[%s3 + $0x8] sm:$0xff]
  %171 = vset.pattern.permute.xlu0 0
  %172 = vperm.xlu0 %171, %v168
  %v173 = vpop.permute.xlu0 %172
  %176 = vset.pattern.permute.xlu0 0
  %177 = vperm.xlu0 %176, %v169
  %v178 = vpop.permute.xlu0 %177
  %v180 = vmul.f32 %v166, %v173
  %v181 = vmul.f32 %v167, %v178
  %v182 = vld [vmem:[%s4] sm:$0xff]
  %v183 = vld [vmem:[%s4 + $0x8] sm:$0xff]
  %185 = vset.pattern.permute.xlu0 0
  %186 = vperm.xlu0 %185, %v182
  %v187 = vpop.permute.xlu0 %186
  %190 = vset.pattern.permute.xlu0 0
  %191 = vperm.xlu0 %190, %v183
  %v192 = vpop.permute.xlu0 %191
  %v194 = vadd.f32 %v180, %v187
  %v195 = vadd.f32 %v181, %v192
  %v196 = vld [vmem:[%s5] sm:$0xff]
  %v197 = vld [vmem:[%s6] sm:$0xff]
  %199 = vset.pattern.permute.xlu0 0
  %200 = vperm.xlu0 %199, %v197
  %v201 = vpop.permute.xlu0 %200
  %vm203 = vcmask 130048
  %v205 = vsel %vm203, %v196, 0
  %207 = vmatpush.msra.mxu0 0.0
  %208 = vmatpush.msra.mxu0 0.0
  %209 = vmatpush.msra.mxu0 0.0
  %210 = vmatpush.msra.mxu0 0.0
  %211 = vmatpush.msra.mxu0 0.0
  %212 = vmatpush.msra.mxu0 0.0
  %213 = vmatpush.msra.mxu0 0.0
  %214 = vmatpush.msra.mxu0 0.0
  %215 = vmatpush.msra.mxu0 0.0
  %216 = vmatpush.msra.mxu0 0.0
  %217 = vmatpush.msra.mxu0 0.0
  %218 = vmatpush.msra.mxu0 0.0
  %219 = vmatpush.msra.mxu0 0.0
  %220 = vmatpush.msra.mxu0 0.0
  %221 = vmatpush.msra.mxu0 %v195
  %222 = vmatpush.msra.mxu0 %v194
  %223 = vmatmul.f32.gmra.mxu0 %v205
  %v224 = vpop.f32.mrf.mxu0
  %v225 = vadd.f32 %v201, %v224
  %226 = vdwg.mxu0
  %v227 = vmul.f32 %v225, 0.5
  %v228 = vtanh.pop %v227
  %v229 = vadd.f32 %v228, 1.0
  %v230 = vmul.f32 %v227, %v229
  %v231 = vld [vmem:[%s7] sm:$0xff]
  %233 = vset.pattern.permute.xlu0 0
  %234 = vperm.xlu0 %233, %v231
  %v235 = vpop.permute.xlu0 %234
  %v237 = vmul.f32 %v230, %v235
  %v238 = vld [vmem:[%s8] sm:$0xff]
  %240 = vset.pattern.permute.xlu0 0
  %241 = vperm.xlu0 %240, %v238
  %v242 = vpop.permute.xlu0 %241
  %v244 = vadd.f32 %v237, %v242
  %v245 = vld [vmem:[%s9] sm:$0xf]
  %v246 = vld [vmem:[%s10] sm:$0xf]
  %248 = vset.pattern.permute.xlu0 0
  %249 = vperm.xlu0 %248, %v246
  %v250 = vpop.permute.xlu0 %249
  %v253 = vsel %vm82, %v245, 0
  %255 = vmatpush.msra.mxu0 0.0
  %256 = vmatpush.msra.mxu0 0.0
  %257 = vmatpush.msra.mxu0 0.0
  %258 = vmatpush.msra.mxu0 0.0
  %259 = vmatpush.msra.mxu0 0.0
  %260 = vmatpush.msra.mxu0 0.0
  %261 = vmatpush.msra.mxu0 0.0
  %262 = vmatpush.msra.mxu0 0.0
  %263 = vmatpush.msra.mxu0 0.0
  %264 = vmatpush.msra.mxu0 0.0
  %265 = vmatpush.msra.mxu0 0.0
  %266 = vmatpush.msra.mxu0 0.0
  %267 = vmatpush.msra.mxu0 0.0
  %268 = vmatpush.msra.mxu0 0.0
  %269 = vmatpush.msra.mxu0 0.0
  %270 = vmatpush.msra.mxu0 %v244
  %271 = vmatmul.f32.gmra.mxu0 %v253
  %v272 = vpop.f32.mrf.mxu0
  %v273 = vadd.f32 %v250, %v272
  %274 = vdwg.mxu0
  %v275 = vmul.f32 %v273, 0.5
  %v276 = vtanh.pop %v275
  %v277 = vadd.f32 %v276, 1.0
  %v278 = vmul.f32 %v275, %v277
  %v279 = vld [vmem:[%s11] sm:$0xf]
  %281 = vset.pattern.permute.xlu0 0
  %282 = vperm.xlu0 %281, %v279
  %v283 = vpop.permute.xlu0 %282
  %v285 = vmul.f32 %v278, %v283
  %v286 = vld [vmem:[%s12] sm:$0xf]
  %288 = vset.pattern.permute.xlu0 0
  %289 = vperm.xlu0 %288, %v286
  %v290 = vpop.permute.xlu0 %289
  %v292 = vadd.f32 %v285, %v290
  %v293 = vld [vmem:[%s13] sm:$0x1]
  %v294 = vld [vmem:[#allocation2] sm:$0x1]
  %296 = vset.pattern.permute.xlu0 0
  %297 = vperm.xlu0 %296, %v294
  %v298 = vpop.permute.xlu0 %297
  %v300 = vperm.slane %v298, 0
  %vm301 = vcmask 31744
  %v303 = vsel %vm301, %v293, 0
  %vm305 = vcmask 1043456
  %v307 = vsel %vm305, %v292, 0
  %309 = vmatpush.msra.mxu0 0.0
  %310 = vmatpush.msra.mxu0 0.0
  %311 = vmatpush.msra.mxu0 0.0
  %312 = vmatpush.msra.mxu0 0.0
  %313 = vmatpush.msra.mxu0 0.0
  %314 = vmatpush.msra.mxu0 0.0
  %315 = vmatpush.msra.mxu0 0.0
  %316 = vmatpush.msra.mxu0 0.0
  %317 = vmatpush.msra.mxu0 0.0
  %318 = vmatpush.msra.mxu0 0.0
  %319 = vmatpush.msra.mxu0 0.0
  %320 = vmatpush.msra.mxu0 0.0
  %321 = vmatpush.msra.mxu0 0.0
  %322 = vmatpush.msra.mxu0 0.0
  %323 = vmatpush.msra.mxu0 0.0
  %324 = vmatpush.msra.mxu0 %v307
  %325 = vmatmul.f32.gmra.mxu0 %v303
  %v326 = vpop.f32.mrf.mxu0
  %v327 = vadd.f32 %v300, %v326
  %328 = vdwg.mxu0
  %v329 = vmul.f32 %v327, 0.5
  %v330 = vtanh.pop %v329
  %v331 = vadd.f32 %v330, 1.0
  %v332 = vmul.f32 %v331, 0.5
  %333 = vst [vmem:[%s15] sm:$0x1] %v332
  // Predicated region
  $region62: #{network_forward.3} parent=0 // pred_check
    _
  $region63: #{network_forward.3} parent=0 // pred_check_branch
    %335 = sbr.rel (0) target = $region65
  $region64: #{network_forward.3} parent=0 // pred_region
    _
  $region65: #{network_forward.3} parent=0 // pred_fallthru
    _
  // Predicated region
  $region66: #{network_forward.3} parent=0 // pred_check
    _
  $region67: #{network_forward.3} parent=0 // pred_check_branch
    %337 = sbr.rel (0) target = $region69
  $region68: #{network_forward.3} parent=0 // pred_region
    _
  $region69: #{network_forward.3} parent=0 // pred_fallthru
    _

// kernel: network_forward.2
$region0: #{network_forward.2}
  #allocation0 [shape = 'u32[]', space=smem, size = 0x4, offset = 0x4, fixed_abs, tag = 'smem constant byte address 0x4 - core index']
  #allocation1 [shape = 'u32[72,128]{1,0:T(1,128)}', space=vmem, size = 0x9000, scoped, tag = 'internal scratch']
  %s0 = inlined_call_operand.vmem [shape: f32[128,8], index: 0, kind: input, shape index: {}]
  %s1 = inlined_call_operand.vmem [shape: f32[16,8], index: 1, kind: input, shape index: {}]
  %s2 = inlined_call_operand.vmem [shape: f32[16,1], index: 2, kind: input, shape index: {}]
  %s3 = inlined_call_operand.vmem [shape: f32[16,1], index: 3, kind: input, shape index: {}]
  %s4 = inlined_call_operand.vmem [shape: f32[16,1], index: 4, kind: input, shape index: {}]
  %s5 = inlined_call_operand.vmem [shape: f32[8,16], index: 5, kind: input, shape index: {}]
  %s6 = inlined_call_operand.vmem [shape: f32[8,1], index: 6, kind: input, shape index: {}]
  %s7 = inlined_call_operand.vmem [shape: f32[8,1], index: 7, kind: input, shape index: {}]
  %s8 = inlined_call_operand.vmem [shape: f32[8,1], index: 8, kind: input, shape index: {}]
  %s9 = inlined_call_operand.vmem [shape: f32[4,8], index: 9, kind: input, shape index: {}]
  %s10 = inlined_call_operand.vmem [shape: f32[4,1], index: 10, kind: input, shape index: {}]
  %s11 = inlined_call_operand.vmem [shape: f32[16,1], index: 11, kind: output, shape index: {0}]
  %s12 = inlined_call_operand.vmem [shape: f32[16,1], index: 12, kind: output, shape index: {1}]
  %s13 = inlined_call_operand.vmem [shape: f32[8,1], index: 13, kind: output, shape index: {2}]
  %s14 = inlined_call_operand.vmem [shape: f32[8,1], index: 14, kind: output, shape index: {3}]
  %s15 = inlined_call_operand.vmem [shape: f32[4,1], index: 15, kind: output, shape index: {4}]
  %s16 = inlined_call_operand.vmem [shape: f32[4,1], index: 16, kind: output, shape index: {5}]
  %17 = xla_tuple %s11, %s12, %s13, %s14, %s15, %s16
  %s18 = sld [smem:[#allocation0]]
  $region133: #{network_forward.2} parent=0
    _
  %s20 = ssub.s32 1, %s18
  %s21 = scalar_select 0, %s20, %s18
  loop: start=0, step=1, limit=5
  $region2: #{network_forward.2} parent=0 // loop_pre_header
    _
  $region3: #{network_forward.2} parent=0 // loop_header
    %s23 = sphi 0, %s27
    %p24 = scmp.ge.s32.totalorder %s23, 5
    %s30 = sphi 0, %s42
    %s31 = sphi 0, %s38
    %s32 = sphi 0, %s30
    %s33 = sphi 0, %s31
    %s34 = sphi 0, %s32
    %s35 = sphi 0, %s33
    %s45 = sphi 0, %s47
    %s48 = sphi 0, %s45
    %s49 = sphi 0, %s48
    %s65 = sphi 0, %s49
    %s69 = sphi 0, %s69
    %s71 = sphi 0, %s69
    %s72 = sphi 0, %s71
    %s86 = sphi 0, %s72
    %s90 = sphi 0, %s90
    %s92 = sphi 0, %s90
    %s93 = sphi 0, %s92
    %s107 = sphi 0, %s93
    %s111 = sphi 0, %s111
    %s113 = sphi 0, %s111
    %s114 = sphi 0, %s113
    %s128 = sphi 0, %s114
    %s132 = sphi 0, %s132
    %s134 = sphi 0, %s132
    %s135 = sphi 0, %s134
    %s149 = sphi 0, %s135
    %s153 = sphi 0, %s153
    %s155 = sphi 0, %s153
    %s156 = sphi 0, %s155
    %s170 = sphi 0, %s156
    %s174 = sphi 0, %s174
    %s176 = sphi 0, %s174
    %s177 = sphi 0, %s176
    %s191 = sphi 0, %s177
    %s195 = sphi 0, %s195
    %s197 = sphi 0, %s195
    %s198 = sphi 0, %s197
    %s212 = sphi 0, %s198
    %s216 = sphi 0, %s216
    %s218 = sphi 0, %s216
    %s219 = sphi 0, %s218
    %s233 = sphi 0, %s219
    %s237 = sphi 0, %s237
    %s239 = sphi 0, %s237
    %s240 = sphi 0, %s239
    %s254 = sphi 0, %s240
    %s258 = sphi 0, %s258
    %s260 = sphi 0, %s258
    %s261 = sphi 0, %s260
    %s275 = sphi 0, %s261
    %s279 = sphi 0, %s279
    %s281 = sphi 0, %s279
    %s282 = sphi 0, %s281
    %s296 = sphi 0, %s282
    %s300 = sphi 0, %s300
    %s302 = sphi 0, %s300
    %s303 = sphi 0, %s302
    %s317 = sphi 0, %s303
    %s321 = sphi 0, %s321
    %s323 = sphi 0, %s321
    %s324 = sphi 0, %s323
    %s338 = sphi 0, %s324
    %s342 = sphi 0, %s342
    %s344 = sphi 0, %s342
    %s345 = sphi 0, %s344
    %s359 = sphi 0, %s345
    %s363 = sphi 0, %s363
    %s365 = sphi 0, %s363
    %s366 = sphi 0, %s365
    %s380 = sphi 0, %s366
    %s384 = sphi 0, %s384
    %s386 = sphi 0, %s384
    %s387 = sphi 0, %s386
    %s401 = sphi 0, %s387
  $region4: #{network_forward.2} parent=0 // loop_header_branch
    %26 = sbr.rel (%p24) target = $region8
  $region5: #{network_forward.2} parent=0 // loop_body
    %s28 = ssub.s32 %s23, 1
    %s29 = ssub.s32 %s23, 2
    %s36 = sadd.s32 1, %s31
    %p37 = scmp.ge.s32.totalorder %s36, 1
    %s38 = scalar_select %p37, 0, %s36
    %s39 = sadd.s32 1, %s30
    %s40 = scalar_select %p37, %s39, %s30
    %p41 = scmp.ge.s32.totalorder %s40, 3
    %s42 = scalar_select %p41, 0, %s40
    %s43 = ssub.s32 %s31, %s38
    %p44 = scmp.eq.s32.totalorder %s43, 0
    %s46 = sadd.s32 %s45, 1
    %s47 = scalar_select %p44, %s45, %s46
    %p50 = pneg %p44
    %p51 = scmp.eq.s32.totalorder %s23, 2
    %p52 = por %p50, %p51
    %p53 = scmp.ne.s32.totalorder %s45, %s48
    %p54 = scmp.eq.s32.totalorder %s23, 0
    %p55 = por %p53, %p54
    %p56 = scmp.ne.s32.totalorder %s45, %s48
    %p57 = scmp.eq.s32.totalorder %s28, 2
    %p58 = por %p56, %p57
    %p59 = scmp.ne.s32.totalorder %s48, %s49
    %p60 = scmp.eq.s32.totalorder %s28, 0
    %p61 = por %p59, %p60
    %p62 = scmp.ne.s32.totalorder %s48, %s49
    %p63 = scmp.eq.s32.totalorder %s29, 2
    %p64 = por %p62, %p63
    %p66 = scmp.ne.s32.totalorder %s49, %s65
    %p67 = scmp.eq.s32.totalorder %s29, 0
    %p68 = por %p66, %p67
    %s70 = sadd.s32 %s69, 1
    %p73 = scmp.eq.s32.totalorder %s23, 2
    %p74 = scmp.ne.s32.totalorder %s69, %s71
    %p75 = scmp.eq.s32.totalorder %s23, 0
    %p76 = por %p74, %p75
    %p77 = scmp.ne.s32.totalorder %s69, %s71
    %p78 = scmp.eq.s32.totalorder %s28, 2
    %p79 = por %p77, %p78
    %p80 = scmp.ne.s32.totalorder %s71, %s72
    %p81 = scmp.eq.s32.totalorder %s28, 0
    %p82 = por %p80, %p81
    %p83 = scmp.ne.s32.totalorder %s71, %s72
    %p84 = scmp.eq.s32.totalorder %s29, 2
    %p85 = por %p83, %p84
    %p87 = scmp.ne.s32.totalorder %s72, %s86
    %p88 = scmp.eq.s32.totalorder %s29, 0
    %p89 = por %p87, %p88
    %s91 = sadd.s32 %s90, 1
    %p94 = scmp.eq.s32.totalorder %s23, 2
    %p95 = scmp.ne.s32.totalorder %s90, %s92
    %p96 = scmp.eq.s32.totalorder %s23, 0
    %p97 = por %p95, %p96
    %p98 = scmp.ne.s32.totalorder %s90, %s92
    %p99 = scmp.eq.s32.totalorder %s28, 2
    %p100 = por %p98, %p99
    %p101 = scmp.ne.s32.totalorder %s92, %s93
    %p102 = scmp.eq.s32.totalorder %s28, 0
    %p103 = por %p101, %p102
    %p104 = scmp.ne.s32.totalorder %s92, %s93
    %p105 = scmp.eq.s32.totalorder %s29, 2
    %p106 = por %p104, %p105
    %p108 = scmp.ne.s32.totalorder %s93, %s107
    %p109 = scmp.eq.s32.totalorder %s29, 0
    %p110 = por %p108, %p109
    %s112 = sadd.s32 %s111, 1
    %p115 = scmp.eq.s32.totalorder %s23, 2
    %p116 = scmp.ne.s32.totalorder %s111, %s113
    %p117 = scmp.eq.s32.totalorder %s23, 0
    %p118 = por %p116, %p117
    %p119 = scmp.ne.s32.totalorder %s111, %s113
    %p120 = scmp.eq.s32.totalorder %s28, 2
    %p121 = por %p119, %p120
    %p122 = scmp.ne.s32.totalorder %s113, %s114
    %p123 = scmp.eq.s32.totalorder %s28, 0
    %p124 = por %p122, %p123
    %p125 = scmp.ne.s32.totalorder %s113, %s114
    %p126 = scmp.eq.s32.totalorder %s29, 2
    %p127 = por %p125, %p126
    %p129 = scmp.ne.s32.totalorder %s114, %s128
    %p130 = scmp.eq.s32.totalorder %s29, 0
    %p131 = por %p129, %p130
    %s133 = sadd.s32 %s132, 1
    %p136 = scmp.eq.s32.totalorder %s23, 2
    %p137 = scmp.ne.s32.totalorder %s132, %s134
    %p138 = scmp.eq.s32.totalorder %s23, 0
    %p139 = por %p137, %p138
    %p140 = scmp.ne.s32.totalorder %s132, %s134
    %p141 = scmp.eq.s32.totalorder %s28, 2
    %p142 = por %p140, %p141
    %p143 = scmp.ne.s32.totalorder %s134, %s135
    %p144 = scmp.eq.s32.totalorder %s28, 0
    %p145 = por %p143, %p144
    %p146 = scmp.ne.s32.totalorder %s134, %s135
    %p147 = scmp.eq.s32.totalorder %s29, 2
    %p148 = por %p146, %p147
    %p150 = scmp.ne.s32.totalorder %s135, %s149
    %p151 = scmp.eq.s32.totalorder %s29, 0
    %p152 = por %p150, %p151
    %s154 = sadd.s32 %s153, 1
    %p157 = scmp.eq.s32.totalorder %s23, 2
    %p158 = scmp.ne.s32.totalorder %s153, %s155
    %p159 = scmp.eq.s32.totalorder %s23, 0
    %p160 = por %p158, %p159
    %p161 = scmp.ne.s32.totalorder %s153, %s155
    %p162 = scmp.eq.s32.totalorder %s28, 2
    %p163 = por %p161, %p162
    %p164 = scmp.ne.s32.totalorder %s155, %s156
    %p165 = scmp.eq.s32.totalorder %s28, 0
    %p166 = por %p164, %p165
    %p167 = scmp.ne.s32.totalorder %s155, %s156
    %p168 = scmp.eq.s32.totalorder %s29, 2
    %p169 = por %p167, %p168
    %p171 = scmp.ne.s32.totalorder %s156, %s170
    %p172 = scmp.eq.s32.totalorder %s29, 0
    %p173 = por %p171, %p172
    %s175 = sadd.s32 %s174, 1
    %p178 = scmp.eq.s32.totalorder %s23, 2
    %p179 = scmp.ne.s32.totalorder %s174, %s176
    %p180 = scmp.eq.s32.totalorder %s23, 0
    %p181 = por %p179, %p180
    %p182 = scmp.ne.s32.totalorder %s174, %s176
    %p183 = scmp.eq.s32.totalorder %s28, 2
    %p184 = por %p182, %p183
    %p185 = scmp.ne.s32.totalorder %s176, %s177
    %p186 = scmp.eq.s32.totalorder %s28, 0
    %p187 = por %p185, %p186
    %p188 = scmp.ne.s32.totalorder %s176, %s177
    %p189 = scmp.eq.s32.totalorder %s29, 2
    %p190 = por %p188, %p189
    %p192 = scmp.ne.s32.totalorder %s177, %s191
    %p193 = scmp.eq.s32.totalorder %s29, 0
    %p194 = por %p192, %p193
    %s196 = sadd.s32 %s195, 1
    %p199 = scmp.eq.s32.totalorder %s23, 2
    %p200 = scmp.ne.s32.totalorder %s195, %s197
    %p201 = scmp.eq.s32.totalorder %s23, 0
    %p202 = por %p200, %p201
    %p203 = scmp.ne.s32.totalorder %s195, %s197
    %p204 = scmp.eq.s32.totalorder %s28, 2
    %p205 = por %p203, %p204
    %p206 = scmp.ne.s32.totalorder %s197, %s198
    %p207 = scmp.eq.s32.totalorder %s28, 0
    %p208 = por %p206, %p207
    %p209 = scmp.ne.s32.totalorder %s197, %s198
    %p210 = scmp.eq.s32.totalorder %s29, 2
    %p211 = por %p209, %p210
    %p213 = scmp.ne.s32.totalorder %s198, %s212
    %p214 = scmp.eq.s32.totalorder %s29, 0
    %p215 = por %p213, %p214
    %s217 = sadd.s32 %s216, 1
    %p220 = scmp.eq.s32.totalorder %s23, 2
    %p221 = scmp.ne.s32.totalorder %s216, %s218
    %p222 = scmp.eq.s32.totalorder %s23, 0
    %p223 = por %p221, %p222
    %p224 = scmp.ne.s32.totalorder %s216, %s218
    %p225 = scmp.eq.s32.totalorder %s28, 2
    %p226 = por %p224, %p225
    %p227 = scmp.ne.s32.totalorder %s218, %s219
    %p228 = scmp.eq.s32.totalorder %s28, 0
    %p229 = por %p227, %p228
    %p230 = scmp.ne.s32.totalorder %s218, %s219
    %p231 = scmp.eq.s32.totalorder %s29, 2
    %p232 = por %p230, %p231
    %p234 = scmp.ne.s32.totalorder %s219, %s233
    %p235 = scmp.eq.s32.totalorder %s29, 0
    %p236 = por %p234, %p235
    %s238 = sadd.s32 %s237, 1
    %p241 = scmp.eq.s32.totalorder %s23, 2
    %p242 = scmp.ne.s32.totalorder %s237, %s239
    %p243 = scmp.eq.s32.totalorder %s23, 0
    %p244 = por %p242, %p243
    %p245 = scmp.ne.s32.totalorder %s237, %s239
    %p246 = scmp.eq.s32.totalorder %s28, 2
    %p247 = por %p245, %p246
    %p248 = scmp.ne.s32.totalorder %s239, %s240
    %p249 = scmp.eq.s32.totalorder %s28, 0
    %p250 = por %p248, %p249
    %p251 = scmp.ne.s32.totalorder %s239, %s240
    %p252 = scmp.eq.s32.totalorder %s29, 2
    %p253 = por %p251, %p252
    %p255 = scmp.ne.s32.totalorder %s240, %s254
    %p256 = scmp.eq.s32.totalorder %s29, 0
    %p257 = por %p255, %p256
    %s259 = sadd.s32 %s258, 1
    %p262 = scmp.eq.s32.totalorder %s23, 2
    %p263 = scmp.ne.s32.totalorder %s258, %s260
    %p264 = scmp.eq.s32.totalorder %s23, 0
    %p265 = por %p263, %p264
    %p266 = scmp.ne.s32.totalorder %s258, %s260
    %p267 = scmp.eq.s32.totalorder %s28, 2
    %p268 = por %p266, %p267
    %p269 = scmp.ne.s32.totalorder %s260, %s261
    %p270 = scmp.eq.s32.totalorder %s28, 0
    %p271 = por %p269, %p270
    %p272 = scmp.ne.s32.totalorder %s260, %s261
    %p273 = scmp.eq.s32.totalorder %s29, 2
    %p274 = por %p272, %p273
    %p276 = scmp.ne.s32.totalorder %s261, %s275
    %p277 = scmp.eq.s32.totalorder %s29, 0
    %p278 = por %p276, %p277
    %s280 = sadd.s32 %s279, 1
    %p283 = scmp.eq.s32.totalorder %s23, 2
    %p284 = scmp.ne.s32.totalorder %s279, %s281
    %p285 = scmp.eq.s32.totalorder %s23, 0
    %p286 = por %p284, %p285
    %p287 = scmp.ne.s32.totalorder %s279, %s281
    %p288 = scmp.eq.s32.totalorder %s28, 2
    %p289 = por %p287, %p288
    %p290 = scmp.ne.s32.totalorder %s281, %s282
    %p291 = scmp.eq.s32.totalorder %s28, 0
    %p292 = por %p290, %p291
    %p293 = scmp.ne.s32.totalorder %s281, %s282
    %p294 = scmp.eq.s32.totalorder %s29, 2
    %p295 = por %p293, %p294
    %p297 = scmp.ne.s32.totalorder %s282, %s296
    %p298 = scmp.eq.s32.totalorder %s29, 0
    %p299 = por %p297, %p298
    %s301 = sadd.s32 %s300, 1
    %p304 = scmp.eq.s32.totalorder %s23, 2
    %p305 = scmp.ne.s32.totalorder %s300, %s302
    %p306 = scmp.eq.s32.totalorder %s23, 0
    %p307 = por %p305, %p306
    %p308 = scmp.ne.s32.totalorder %s300, %s302
    %p309 = scmp.eq.s32.totalorder %s28, 2
    %p310 = por %p308, %p309
    %p311 = scmp.ne.s32.totalorder %s302, %s303
    %p312 = scmp.eq.s32.totalorder %s28, 0
    %p313 = por %p311, %p312
    %p314 = scmp.ne.s32.totalorder %s302, %s303
    %p315 = scmp.eq.s32.totalorder %s29, 2
    %p316 = por %p314, %p315
    %p318 = scmp.ne.s32.totalorder %s303, %s317
    %p319 = scmp.eq.s32.totalorder %s29, 0
    %p320 = por %p318, %p319
    %s322 = sadd.s32 %s321, 1
    %p325 = scmp.eq.s32.totalorder %s23, 2
    %p326 = scmp.ne.s32.totalorder %s321, %s323
    %p327 = scmp.eq.s32.totalorder %s23, 0
    %p328 = por %p326, %p327
    %p329 = scmp.ne.s32.totalorder %s321, %s323
    %p330 = scmp.eq.s32.totalorder %s28, 2
    %p331 = por %p329, %p330
    %p332 = scmp.ne.s32.totalorder %s323, %s324
    %p333 = scmp.eq.s32.totalorder %s28, 0
    %p334 = por %p332, %p333
    %p335 = scmp.ne.s32.totalorder %s323, %s324
    %p336 = scmp.eq.s32.totalorder %s29, 2
    %p337 = por %p335, %p336
    %p339 = scmp.ne.s32.totalorder %s324, %s338
    %p340 = scmp.eq.s32.totalorder %s29, 0
    %p341 = por %p339, %p340
    %s343 = sadd.s32 %s342, 1
    %p346 = scmp.eq.s32.totalorder %s23, 2
    %p347 = scmp.ne.s32.totalorder %s342, %s344
    %p348 = scmp.eq.s32.totalorder %s23, 0
    %p349 = por %p347, %p348
    %p350 = scmp.ne.s32.totalorder %s342, %s344
    %p351 = scmp.eq.s32.totalorder %s28, 2
    %p352 = por %p350, %p351
    %p353 = scmp.ne.s32.totalorder %s344, %s345
    %p354 = scmp.eq.s32.totalorder %s28, 0
    %p355 = por %p353, %p354
    %p356 = scmp.ne.s32.totalorder %s344, %s345
    %p357 = scmp.eq.s32.totalorder %s29, 2
    %p358 = por %p356, %p357
    %p360 = scmp.ne.s32.totalorder %s345, %s359
    %p361 = scmp.eq.s32.totalorder %s29, 0
    %p362 = por %p360, %p361
    %s364 = sadd.s32 %s363, 1
    %p367 = scmp.eq.s32.totalorder %s23, 2
    %p368 = scmp.ne.s32.totalorder %s363, %s365
    %p369 = scmp.eq.s32.totalorder %s23, 0
    %p370 = por %p368, %p369
    %p371 = scmp.ne.s32.totalorder %s363, %s365
    %p372 = scmp.eq.s32.totalorder %s28, 2
    %p373 = por %p371, %p372
    %p374 = scmp.ne.s32.totalorder %s365, %s366
    %p375 = scmp.eq.s32.totalorder %s28, 0
    %p376 = por %p374, %p375
    %p377 = scmp.ne.s32.totalorder %s365, %s366
    %p378 = scmp.eq.s32.totalorder %s29, 2
    %p379 = por %p377, %p378
    %p381 = scmp.ne.s32.totalorder %s366, %s380
    %p382 = scmp.eq.s32.totalorder %s29, 0
    %p383 = por %p381, %p382
    %s385 = sadd.s32 %s384, 1
    %p388 = scmp.eq.s32.totalorder %s23, 2
    %p389 = scmp.ne.s32.totalorder %s384, %s386
    %p390 = scmp.eq.s32.totalorder %s23, 0
    %p391 = por %p389, %p390
    %p392 = scmp.ne.s32.totalorder %s384, %s386
    %p393 = scmp.eq.s32.totalorder %s28, 2
    %p394 = por %p392, %p393
    %p395 = scmp.ne.s32.totalorder %s386, %s387
    %p396 = scmp.eq.s32.totalorder %s28, 0
    %p397 = por %p395, %p396
    %p398 = scmp.ne.s32.totalorder %s386, %s387
    %p399 = scmp.eq.s32.totalorder %s29, 2
    %p400 = por %p398, %p399
    %p402 = scmp.ne.s32.totalorder %s387, %s401
    %p403 = scmp.eq.s32.totalorder %s29, 0
    %p404 = por %p402, %p403
    %p405 = scmp.le.s32.totalorder 1, %s23
    %p406 = scmp.lt.s32.totalorder %s23, 4
    %p407 = pnand %p405, %p406
    %p408 = pneg %p407
    // Predicated region
    $region9: #{network_forward.2} parent=5 // pred_check
      _
    $region10: #{network_forward.2} parent=5 // pred_check_branch
      %410 = sbr.rel (%p407) target = $region12
    $region11: #{network_forward.2} parent=5 // pred_region
      %s411 = ssub.s32 %s23, 1
      // Predicated region
      $region13: #{network_forward.2} parent=11 // pred_check
        %p412 = pneg %p61
      $region14: #{network_forward.2} parent=11 // pred_check_branch
        %414 = sbr.rel (%p412) target = $region16
      $region15: #{network_forward.2} parent=11 // pred_region
        %s415 = smul.u32 16, %s33
        %p416 = scmp.lt.s32.totalorder %s415, 15
        %s417 = scalar_select %p416, %s415, 15
        %s418 = smul.addr %s417, 8
        %s419 = scalar_lea.vmem %s0, %s418
        %s420 = smul.u32 16, %s33
      $region16: #{network_forward.2} parent=11 // pred_fallthru
        _
      // Predicated region
      $region17: #{network_forward.2} parent=11 // pred_check
        %p421 = pneg %p82
      $region18: #{network_forward.2} parent=11 // pred_check_branch
        %423 = sbr.rel (%p421) target = $region20
      $region19: #{network_forward.2} parent=11 // pred_region
        _
      $region20: #{network_forward.2} parent=11 // pred_fallthru
        _
      // Predicated region
      $region21: #{network_forward.2} parent=11 // pred_check
        %p424 = pneg %p103
      $region22: #{network_forward.2} parent=11 // pred_check_branch
        %426 = sbr.rel (%p424) target = $region24
      $region23: #{network_forward.2} parent=11 // pred_region
        _
      $region24: #{network_forward.2} parent=11 // pred_fallthru
        _
      // Predicated region
      $region25: #{network_forward.2} parent=11 // pred_check
        %p427 = pneg %p124
      $region26: #{network_forward.2} parent=11 // pred_check_branch
        %429 = sbr.rel (%p427) target = $region28
      $region27: #{network_forward.2} parent=11 // pred_region
        _
      $region28: #{network_forward.2} parent=11 // pred_fallthru
        _
      // Predicated region
      $region29: #{network_forward.2} parent=11 // pred_check
        %p430 = pneg %p145
      $region30: #{network_forward.2} parent=11 // pred_check_branch
        %432 = sbr.rel (%p430) target = $region32
      $region31: #{network_forward.2} parent=11 // pred_region
        _
      $region32: #{network_forward.2} parent=11 // pred_fallthru
        _
      // Predicated region
      $region33: #{network_forward.2} parent=11 // pred_check
        %p433 = pneg %p166
      $region34: #{network_forward.2} parent=11 // pred_check_branch
        %435 = sbr.rel (%p433) target = $region36
      $region35: #{network_forward.2} parent=11 // pred_region
        _
      $region36: #{network_forward.2} parent=11 // pred_fallthru
        _
      // Predicated region
      $region37: #{network_forward.2} parent=11 // pred_check
        %p436 = pneg %p187
      $region38: #{network_forward.2} parent=11 // pred_check_branch
        %438 = sbr.rel (%p436) target = $region40
      $region39: #{network_forward.2} parent=11 // pred_region
        _
      $region40: #{network_forward.2} parent=11 // pred_fallthru
        _
      // Predicated region
      $region41: #{network_forward.2} parent=11 // pred_check
        %p439 = pneg %p208
      $region42: #{network_forward.2} parent=11 // pred_check_branch
        %441 = sbr.rel (%p439) target = $region44
      $region43: #{network_forward.2} parent=11 // pred_region
        _
      $region44: #{network_forward.2} parent=11 // pred_fallthru
        _
      // Predicated region
      $region45: #{network_forward.2} parent=11 // pred_check
        %p442 = pneg %p229
      $region46: #{network_forward.2} parent=11 // pred_check_branch
        %444 = sbr.rel (%p442) target = $region48
      $region47: #{network_forward.2} parent=11 // pred_region
        _
      $region48: #{network_forward.2} parent=11 // pred_fallthru
        _
      // Predicated region
      $region49: #{network_forward.2} parent=11 // pred_check
        %p445 = pneg %p250
      $region50: #{network_forward.2} parent=11 // pred_check_branch
        %447 = sbr.rel (%p445) target = $region52
      $region51: #{network_forward.2} parent=11 // pred_region
        _
      $region52: #{network_forward.2} parent=11 // pred_fallthru
        _
      // Predicated region
      $region53: #{network_forward.2} parent=11 // pred_check
        %p448 = pneg %p271
      $region54: #{network_forward.2} parent=11 // pred_check_branch
        %450 = sbr.rel (%p448) target = $region56
      $region55: #{network_forward.2} parent=11 // pred_region
        _
      $region56: #{network_forward.2} parent=11 // pred_fallthru
        _
    $region12: #{network_forward.2} parent=5 // pred_fallthru
      _
    %p451 = scmp.lt.s32.totalorder %s23, 3
    // Predicated region
    $region57: #{network_forward.2} parent=5 // pred_check
      %p452 = pneg %p451
    $region58: #{network_forward.2} parent=5 // pred_check_branch
      %454 = sbr.rel (%p452) target = $region60
    $region59: #{network_forward.2} parent=5 // pred_region
      _
    $region60: #{network_forward.2} parent=5 // pred_fallthru
      _
    %p455 = scmp.le.s32.totalorder 1, %s23
    %p456 = scmp.lt.s32.totalorder %s23, 4
    %p457 = pnand %p455, %p456
    %p458 = pneg %p457
    // Predicated region
    $region61: #{network_forward.2} parent=5 // pred_check
      _
    $region62: #{network_forward.2} parent=5 // pred_check_branch
      %460 = sbr.rel (%p457) target = $region64
    $region63: #{network_forward.2} parent=5 // pred_region
      %s461 = ssub.s32 %s23, 1
      %s462 = smul.u32 16, %s33
      %p463 = scmp.lt.s32.totalorder %s462, 15
      %s464 = scalar_select %p463, %s462, 15
      %s465 = smul.addr %s464, 8
      %s466 = scalar_lea.vmem %s0, %s465
      %p467 = pneg %p61
      %p468 = pneg %p58
      %p469 = pneg %p82
      %p470 = pneg %p79
      %p471 = pneg %p103
      %p472 = pneg %p100
      %p473 = pneg %p124
      %p474 = pneg %p121
      %p475 = pneg %p145
      %p476 = pneg %p142
      %p477 = pneg %p166
      %p478 = pneg %p163
      %p479 = pneg %p187
      %p480 = pneg %p184
      %p481 = pneg %p208
      %p482 = pneg %p205
      %p483 = pneg %p229
      %p484 = pneg %p226
      %p485 = pneg %p250
      %p486 = pneg %p247
      %p487 = pneg %p271
      %p488 = pneg %p268
      %p489 = pneg %p292
      %p490 = pneg %p289
      %p491 = pneg %p313
      %p492 = pneg %p310
      %p493 = pneg %p334
      %p494 = pneg %p331
      %p495 = pneg %p355
      %p496 = pneg %p352
      %p497 = pneg %p376
      %p498 = pneg %p373
      %p499 = pneg %p397
      %p500 = pneg %p394
      %s501 = smul.u32 16, %s33
      %p502 = scmp.lt.s32.totalorder %s501, 15
      %s503 = scalar_select %p502, %s501, 15
      %s504 = smul.addr %s503, 8
      %s505 = scalar_lea.vmem %s0, %s504
      %s506 = smul.u32 16, %s33
      %p507 = scmp.eq.s32.totalorder %s32, 0
      %p508 = scmp.eq.s32.totalorder %s33, 0
      %p509 = pnand %p507, %p508
      %p510 = pneg %p509
      // Predicated region
      $region65: #{network_forward.2} parent=63 // pred_check
        _
      $region66: #{network_forward.2} parent=63 // pred_check_branch
        %512 = sbr.rel (%p509) target = $region68
      $region67: #{network_forward.2} parent=63 // pred_region
        %vm513 = vcmask 7168
        %514 = vst.msk [vmem:[%s11] sm:$0xff] %vm513, 0.0
        %515 = vst.msk [vmem:[%s11 + $0x8] sm:$0xff] %vm513, 0.0
        %516 = vst.msk [vmem:[%s12] sm:$0xff] %vm513, 0.0
        %517 = vst.msk [vmem:[%s12 + $0x8] sm:$0xff] %vm513, 0.0
        %518 = vst.msk [vmem:[%s13] sm:$0xff] %vm513, 0.0
        %519 = vst.msk [vmem:[%s14] sm:$0xff] %vm513, 0.0
        %vm520 = vcmask 3072
        %521 = vst.msk [vmem:[%s15] sm:$0xf] %vm520, 0.0
        %522 = vst.msk [vmem:[%s16] sm:$0xf] %vm520, 0.0
      $region68: #{network_forward.2} parent=63 // pred_fallthru
        _
      %v523 = vld [vmem:[%s505] sm:$0xff]
      %v524 = vld [vmem:[%s505 + $0x8] sm:$0xff]
      %v525 = vld [vmem:[%s505 + $0x10] sm:$0xff]
      %v526 = vld [vmem:[%s505 + $0x18] sm:$0xff]
      %v527 = vld [vmem:[%s505 + $0x20] sm:$0xff]
      %v528 = vld [vmem:[%s505 + $0x28] sm:$0xff]
      %v529 = vld [vmem:[%s505 + $0x30] sm:$0xff]
      %v530 = vld [vmem:[%s505 + $0x38] sm:$0xff]
      %v531 = vld [vmem:[%s505 + $0x40] sm:$0xff]
      %v532 = vld [vmem:[%s505 + $0x48] sm:$0xff]
      %v533 = vld [vmem:[%s505 + $0x50] sm:$0xff]
      %v534 = vld [vmem:[%s505 + $0x58] sm:$0xff]
      %v535 = vld [vmem:[%s505 + $0x60] sm:$0xff]
      %v536 = vld [vmem:[%s505 + $0x68] sm:$0xff]
      %v537 = vld [vmem:[%s505 + $0x70] sm:$0xff]
      %v538 = vld [vmem:[%s505 + $0x78] sm:$0xff]
      %v539 = vlaneseq
      %v540 = vand.u32 %v539, 127
      %s541 = smul.u32 %s33, 128
      %v542 = vstv %s541
      %v543 = vadd.s32 %v540, %v542
      %vm544 = vcmp.lt.s32.totalorder %v543, 8
      %v545 = vsel %vm544, 1, 0
      %v546 = vcvt.s32.f32 %v545
      %v547 = vld [vmem:[%s1] sm:$0xff]
      %v548 = vld [vmem:[%s1 + $0x8] sm:$0xff]
      %v549 = vld [vmem:[%s2] sm:$0xff]
      %v550 = vld [vmem:[%s2 + $0x8] sm:$0xff]
      %552 = vset.pattern.permute.xlu0 0
      %553 = vperm.xlu0 %552, %v549
      %v554 = vpop.permute.xlu0 %553
      %557 = vset.pattern.permute.xlu0 0
      %558 = vperm.xlu0 %557, %v550
      %v559 = vpop.permute.xlu0 %558
      %vm561 = vcmask 64512
      %v563 = vsel %vm561, %v547, 0
      %v566 = vsel %vm561, %v548, 0
      %v569 = vsel %vm561, %v523, 0
      %v572 = vsel %vm561, %v524, 0
      %v575 = vsel %vm561, %v525, 0
      %v578 = vsel %vm561, %v526, 0
      %v581 = vsel %vm561, %v527, 0
      %v584 = vsel %vm561, %v528, 0
      %v587 = vsel %vm561, %v529, 0
      %v590 = vsel %vm561, %v530, 0
      %v593 = vsel %vm561, %v531, 0
      %v596 = vsel %vm561, %v532, 0
      %v599 = vsel %vm561, %v533, 0
      %v602 = vsel %vm561, %v534, 0
      %v605 = vsel %vm561, %v535, 0
      %v608 = vsel %vm561, %v536, 0
      %v611 = vsel %vm561, %v537, 0
      %v614 = vsel %vm561, %v538, 0
      %616 = vmatpush.xpose.msra.mxu0 %v614
      %617 = vmatpush.xpose.msra.mxu0 %v611
      %618 = vmatpush.xpose.msra.mxu0 %v608
      %619 = vmatpush.xpose.msra.mxu0 %v605
      %620 = vmatpush.xpose.msra.mxu0 %v602
      %621 = vmatpush.xpose.msra.mxu0 %v599
      %622 = vmatpush.xpose.msra.mxu0 %v596
      %623 = vmatpush.xpose.msra.mxu0 %v593
      %624 = vmatpush.xpose.msra.mxu0 %v590
      %625 = vmatpush.xpose.msra.mxu0 %v587
      %626 = vmatpush.xpose.msra.mxu0 %v584
      %627 = vmatpush.xpose.msra.mxu0 %v581
      %628 = vmatpush.xpose.msra.mxu0 %v578
      %629 = vmatpush.xpose.msra.mxu0 %v575
      %630 = vmatpush.xpose.msra.mxu0 %v572
      %631 = vmatpush.xpose.msra.mxu0 %v569
      %632 = vmatmul.f32.gmra.mxu0 %v563
      %v633 = vpop.f32.mrf.mxu0
      %v634 = vadd.f32 %v554, %v633
      %635 = vmatmul.f32.gmra.mxu0 %v566
      %v636 = vpop.f32.mrf.mxu0
      %v637 = vadd.f32 %v559, %v636
      %638 = vdwg.mxu0
      %v639 = vmul.f32 %v634, 0.5
      %v640 = vmul.f32 %v637, 0.5
      %v641 = vtanh.pop %v639
      %v642 = vtanh.pop %v640
      %v643 = vadd.f32 %v641, 1.0
      %v644 = vadd.f32 %v642, 1.0
      %v645 = vmul.f32 %v639, %v643
      %v646 = vmul.f32 %v640, %v644
      // Predicated region
      $region69: #{network_forward.2} parent=63 // pred_check
        %p647 = pneg %p507
      $region70: #{network_forward.2} parent=63 // pred_check_branch
        %649 = sbr.rel (%p647) target = $region72
      $region71: #{network_forward.2} parent=63 // pred_region
        %v650 = vmul.f32 %v645, %v546
        %v651 = vmul.f32 %v646, %v546
        %v652 = vld [vmem:[%s11] sm:$0xff]
        %v653 = vld [vmem:[%s11 + $0x8] sm:$0xff]
        %654 = vadd.xlane.f32.xlu0 %v650
        %v655 = vpop.xlane.xlu0 %654
        %656 = vadd.xlane.f32.xlu0 %v651
        %v657 = vpop.xlane.xlu0 %656
        %v658 = vadd.f32 %v652, %v655
        %v659 = vadd.f32 %v653, %v657
        %vm660 = vcmask 7168
        %661 = vst.msk [vmem:[%s11] sm:$0xff] %vm660, %v658
        %662 = vst.msk [vmem:[%s11 + $0x8] sm:$0xff] %vm660, %v659
        %v663 = vld [vmem:[%s12] sm:$0xff]
        %v664 = vld [vmem:[%s12 + $0x8] sm:$0xff]
        %v665 = vmul.f32 %v650, %v645
        %v666 = vmul.f32 %v651, %v646
        %667 = vadd.xlane.f32.xlu0 %v665
        %v668 = vpop.xlane.xlu0 %667
        %669 = vadd.xlane.f32.xlu0 %v666
        %v670 = vpop.xlane.xlu0 %669
        %v671 = vadd.f32 %v663, %v668
        %v672 = vadd.f32 %v664, %v670
        %673 = vst.msk [vmem:[%s12] sm:$0xff] %vm660, %v671
        %674 = vst.msk [vmem:[%s12 + $0x8] sm:$0xff] %vm660, %v672
      $region72: #{network_forward.2} parent=63 // pred_fallthru
        _
      %p675 = scmp.eq.s32.totalorder %s32, 1
      // Predicated region
      $region73: #{network_forward.2} parent=63 // pred_check
        %p676 = pneg %p675
      $region74: #{network_forward.2} parent=63 // pred_check_branch
        %678 = sbr.rel (%p676) target = $region76
      $region75: #{network_forward.2} parent=63 // pred_region
        %v679 = vld [vmem:[%s11] sm:$0xff]
        %v680 = vld [vmem:[%s11 + $0x8] sm:$0xff]
        %v681 = vld [vmem:[%s12] sm:$0xff]
        %v682 = vld [vmem:[%s12 + $0x8] sm:$0xff]
        %v683 = vld [vmem:[%s3] sm:$0xff]
        %v684 = vld [vmem:[%s3 + $0x8] sm:$0xff]
        %v685 = vld [vmem:[%s4] sm:$0xff]
        %v686 = vld [vmem:[%s4 + $0x8] sm:$0xff]
        %v687 = vmul.f32 %v679, 0.125
        %v688 = vmul.f32 %v680, 0.125
        %v689 = vmul.f32 %v681, 0.125
        %v690 = vmul.f32 %v682, 0.125
        %v691 = vmul.f32 %v687, %v687
        %v692 = vmul.f32 %v688, %v688
        %v693 = vsub.f32 %v689, %v691
        %v694 = vsub.f32 %v690, %v692
        %v695 = vadd.f32 %v693, 1e-05
        %v696 = vadd.f32 %v694, 1e-05
        %v697 = vrsqrt.pop %v695
        %v698 = vmul.f32 %v697, %v695
        %v699 = vmul.f32 %v698, %v697
        %v700 = vmul.f32 0.5, %v699
        %v701 = vsub.f32 1.5, %v700
        %v702 = vmul.f32 %v697, %v701
        %vm703 = vweird.f32 %v695
        %vm704 = vweird.f32 %v697
        %vm705 = vmor %vm703, %vm704
        %v706 = vsel %vm705, %v697, %v702
        %v707 = vrsqrt.pop %v696
        %v708 = vmul.f32 %v707, %v696
        %v709 = vmul.f32 %v708, %v707
        %v710 = vmul.f32 0.5, %v709
        %v711 = vsub.f32 1.5, %v710
        %v712 = vmul.f32 %v707, %v711
        %vm713 = vweird.f32 %v696
        %vm714 = vweird.f32 %v707
        %vm715 = vmor %vm713, %vm714
        %v716 = vsel %vm715, %v707, %v712
        %v717 = vmul.f32 %v683, %v706
        %v718 = vmul.f32 %v684, %v716
        %v719 = vmul.f32 %v687, %v717
        %v720 = vmul.f32 %v688, %v718
        %v721 = vsub.f32 %v685, %v719
        %v722 = vsub.f32 %v686, %v720
        %724 = vset.pattern.permute.xlu0 0
        %725 = vperm.xlu0 %724, %v717
        %v726 = vpop.permute.xlu0 %725
        %729 = vset.pattern.permute.xlu0 0
        %730 = vperm.xlu0 %729, %v718
        %v731 = vpop.permute.xlu0 %730
        %v733 = vmul.f32 %v645, %v726
        %v734 = vmul.f32 %v646, %v731
        %736 = vset.pattern.permute.xlu0 0
        %737 = vperm.xlu0 %736, %v721
        %v738 = vpop.permute.xlu0 %737
        %741 = vset.pattern.permute.xlu0 0
        %742 = vperm.xlu0 %741, %v722
        %v743 = vpop.permute.xlu0 %742
        %v745 = vadd.f32 %v733, %v738
        %v746 = vadd.f32 %v734, %v743
        %v747 = vld [vmem:[%s5] sm:$0xff]
        %v748 = vld [vmem:[%s6] sm:$0xff]
        %750 = vset.pattern.permute.xlu0 0
        %751 = vperm.xlu0 %750, %v748
        %v752 = vpop.permute.xlu0 %751
        %vm754 = vcmask 130048
        %v756 = vsel %vm754, %v747, 0
        %758 = vmatpush.msra.mxu0 0.0
        %759 = vmatpush.msra.mxu0 0.0
        %760 = vmatpush.msra.mxu0 0.0
        %761 = vmatpush.msra.mxu0 0.0
        %762 = vmatpush.msra.mxu0 0.0
        %763 = vmatpush.msra.mxu0 0.0
        %764 = vmatpush.msra.mxu0 0.0
        %765 = vmatpush.msra.mxu0 0.0
        %766 = vmatpush.msra.mxu0 0.0
        %767 = vmatpush.msra.mxu0 0.0
        %768 = vmatpush.msra.mxu0 0.0
        %769 = vmatpush.msra.mxu0 0.0
        %770 = vmatpush.msra.mxu0 0.0
        %771 = vmatpush.msra.mxu0 0.0
        %772 = vmatpush.msra.mxu0 %v746
        %773 = vmatpush.msra.mxu0 %v745
        %774 = vmatmul.f32.gmra.mxu0 %v756
        %v775 = vpop.f32.mrf.mxu0
        %v776 = vadd.f32 %v752, %v775
        %777 = vdwg.mxu0
        %v778 = vmul.f32 %v776, 0.5
        %v779 = vtanh.pop %v778
        %v780 = vadd.f32 %v779, 1.0
        %v781 = vmul.f32 %v778, %v780
        %v782 = vmul.f32 %v781, %v546
        %v783 = vld [vmem:[%s13] sm:$0xff]
        %784 = vadd.xlane.f32.xlu0 %v782
        %v785 = vpop.xlane.xlu0 %784
        %v786 = vadd.f32 %v783, %v785
        %vm787 = vcmask 7168
        %788 = vst.msk [vmem:[%s13] sm:$0xff] %vm787, %v786
        %v789 = vld [vmem:[%s14] sm:$0xff]
        %v790 = vmul.f32 %v782, %v781
        %791 = vadd.xlane.f32.xlu0 %v790
        %v792 = vpop.xlane.xlu0 %791
        %v793 = vadd.f32 %v789, %v792
        %794 = vst.msk [vmem:[%s14] sm:$0xff] %vm787, %v793
      $region76: #{network_forward.2} parent=63 // pred_fallthru
        _
      %p795 = scmp.eq.s32.totalorder %s32, 2
      // Predicated region
      $region77: #{network_forward.2} parent=63 // pred_check
        %p796 = pneg %p795
      $region78: #{network_forward.2} parent=63 // pred_check_branch
        %798 = sbr.rel (%p796) target = $region80
      $region79: #{network_forward.2} parent=63 // pred_region
        %v799 = vld [vmem:[%s11] sm:$0xff]
        %v800 = vld [vmem:[%s11 + $0x8] sm:$0xff]
        %v801 = vld [vmem:[%s12] sm:$0xff]
        %v802 = vld [vmem:[%s12 + $0x8] sm:$0xff]
        %v803 = vld [vmem:[%s3] sm:$0xff]
        %v804 = vld [vmem:[%s3 + $0x8] sm:$0xff]
        %v805 = vld [vmem:[%s4] sm:$0xff]
        %v806 = vld [vmem:[%s4 + $0x8] sm:$0xff]
        %v807 = vmul.f32 %v799, 0.125
        %v808 = vmul.f32 %v800, 0.125
        %v809 = vmul.f32 %v801, 0.125
        %v810 = vmul.f32 %v802, 0.125
        %v811 = vmul.f32 %v807, %v807
        %v812 = vmul.f32 %v808, %v808
        %v813 = vsub.f32 %v809, %v811
        %v814 = vsub.f32 %v810, %v812
        %v815 = vadd.f32 %v813, 1e-05
        %v816 = vadd.f32 %v814, 1e-05
        %v817 = vrsqrt.pop %v815
        %v818 = vmul.f32 %v817, %v815
        %v819 = vmul.f32 %v818, %v817
        %v820 = vmul.f32 0.5, %v819
        %v821 = vsub.f32 1.5, %v820
        %v822 = vmul.f32 %v817, %v821
        %vm823 = vweird.f32 %v815
        %vm824 = vweird.f32 %v817
        %vm825 = vmor %vm823, %vm824
        %v826 = vsel %vm825, %v817, %v822
        %v827 = vrsqrt.pop %v816
        %v828 = vmul.f32 %v827, %v816
        %v829 = vmul.f32 %v828, %v827
        %v830 = vmul.f32 0.5, %v829
        %v831 = vsub.f32 1.5, %v830
        %v832 = vmul.f32 %v827, %v831
        %vm833 = vweird.f32 %v816
        %vm834 = vweird.f32 %v827
        %vm835 = vmor %vm833, %vm834
        %v836 = vsel %vm835, %v827, %v832
        %v837 = vmul.f32 %v803, %v826
        %v838 = vmul.f32 %v804, %v836
        %v839 = vmul.f32 %v807, %v837
        %v840 = vmul.f32 %v808, %v838
        %v841 = vsub.f32 %v805, %v839
        %v842 = vsub.f32 %v806, %v840
        %844 = vset.pattern.permute.xlu0 0
        %845 = vperm.xlu0 %844, %v837
        %v846 = vpop.permute.xlu0 %845
        %849 = vset.pattern.permute.xlu0 0
        %850 = vperm.xlu0 %849, %v838
        %v851 = vpop.permute.xlu0 %850
        %v853 = vmul.f32 %v645, %v846
        %v854 = vmul.f32 %v646, %v851
        %856 = vset.pattern.permute.xlu0 0
        %857 = vperm.xlu0 %856, %v841
        %v858 = vpop.permute.xlu0 %857
        %861 = vset.pattern.permute.xlu0 0
        %862 = vperm.xlu0 %861, %v842
        %v863 = vpop.permute.xlu0 %862
        %v865 = vadd.f32 %v853, %v858
        %v866 = vadd.f32 %v854, %v863
        %v867 = vld [vmem:[%s5] sm:$0xff]
        %v868 = vld [vmem:[%s6] sm:$0xff]
        %870 = vset.pattern.permute.xlu0 0
        %871 = vperm.xlu0 %870, %v868
        %v872 = vpop.permute.xlu0 %871
        %vm874 = vcmask 130048
        %v876 = vsel %vm874, %v867, 0
        %878 = vmatpush.msra.mxu0 0.0
        %879 = vmatpush.msra.mxu0 0.0
        %880 = vmatpush.msra.mxu0 0.0
        %881 = vmatpush.msra.mxu0 0.0
        %882 = vmatpush.msra.mxu0 0.0
        %883 = vmatpush.msra.mxu0 0.0
        %884 = vmatpush.msra.mxu0 0.0
        %885 = vmatpush.msra.mxu0 0.0
        %886 = vmatpush.msra.mxu0 0.0
        %887 = vmatpush.msra.mxu0 0.0
        %888 = vmatpush.msra.mxu0 0.0
        %889 = vmatpush.msra.mxu0 0.0
        %890 = vmatpush.msra.mxu0 0.0
        %891 = vmatpush.msra.mxu0 0.0
        %892 = vmatpush.msra.mxu0 %v866
        %893 = vmatpush.msra.mxu0 %v865
        %894 = vmatmul.f32.gmra.mxu0 %v876
        %v895 = vpop.f32.mrf.mxu0
        %v896 = vadd.f32 %v872, %v895
        %897 = vdwg.mxu0
        %v898 = vmul.f32 %v896, 0.5
        %v899 = vtanh.pop %v898
        %v900 = vadd.f32 %v899, 1.0
        %v901 = vmul.f32 %v898, %v900
        %v902 = vld [vmem:[%s13] sm:$0xff]
        %v903 = vld [vmem:[%s14] sm:$0xff]
        %v904 = vld [vmem:[%s7] sm:$0xff]
        %v905 = vld [vmem:[%s8] sm:$0xff]
        %v906 = vmul.f32 %v902, 0.125
        %v907 = vmul.f32 %v903, 0.125
        %v908 = vmul.f32 %v906, %v906
        %v909 = vsub.f32 %v907, %v908
        %v910 = vadd.f32 %v909, 1e-05
        %v911 = vrsqrt.pop %v910
        %v912 = vmul.f32 %v911, %v910
        %v913 = vmul.f32 %v912, %v911
        %v914 = vmul.f32 0.5, %v913
        %v915 = vsub.f32 1.5, %v914
        %v916 = vmul.f32 %v911, %v915
        %vm917 = vweird.f32 %v910
        %vm918 = vweird.f32 %v911
        %vm919 = vmor %vm917, %vm918
        %v920 = vsel %vm919, %v911, %v916
        %v921 = vmul.f32 %v904, %v920
        %v922 = vmul.f32 %v906, %v921
        %v923 = vsub.f32 %v905, %v922
        %925 = vset.pattern.permute.xlu0 0
        %926 = vperm.xlu0 %925, %v921
        %v927 = vpop.permute.xlu0 %926
        %v929 = vmul.f32 %v901, %v927
        %931 = vset.pattern.permute.xlu0 0
        %932 = vperm.xlu0 %931, %v923
        %v933 = vpop.permute.xlu0 %932
        %v935 = vadd.f32 %v929, %v933
        %v936 = vld [vmem:[%s9] sm:$0xf]
        %v937 = vld [vmem:[%s10] sm:$0xf]
        %939 = vset.pattern.permute.xlu0 0
        %940 = vperm.xlu0 %939, %v937
        %v941 = vpop.permute.xlu0 %940
        %v944 = vsel %vm561, %v936, 0
        %946 = vmatpush.msra.mxu0 0.0
        %947 = vmatpush.msra.mxu0 0.0
        %948 = vmatpush.msra.mxu0 0.0
        %949 = vmatpush.msra.mxu0 0.0
        %950 = vmatpush.msra.mxu0 0.0
        %951 = vmatpush.msra.mxu0 0.0
        %952 = vmatpush.msra.mxu0 0.0
        %953 = vmatpush.msra.mxu0 0.0
        %954 = vmatpush.msra.mxu0 0.0
        %955 = vmatpush.msra.mxu0 0.0
        %956 = vmatpush.msra.mxu0 0.0
        %957 = vmatpush.msra.mxu0 0.0
        %958 = vmatpush.msra.mxu0 0.0
        %959 = vmatpush.msra.mxu0 0.0
        %960 = vmatpush.msra.mxu0 0.0
        %961 = vmatpush.msra.mxu0 %v935
        %962 = vmatmul.f32.gmra.mxu0 %v944
        %v963 = vpop.f32.mrf.mxu0
        %v964 = vadd.f32 %v941, %v963
        %965 = vdwg.mxu0
        %v966 = vmul.f32 %v964, 0.5
        %v967 = vtanh.pop %v966
        %v968 = vadd.f32 %v967, 1.0
        %v969 = vmul.f32 %v966, %v968
        %v970 = vmul.f32 %v969, %v546
        %v971 = vld [vmem:[%s15] sm:$0xf]
        %vm972 = vcmask 1043456
        %v973 = vsel %vm972, %v970, 0.0
        %974 = vadd.xlane.f32.xlu0 %v973
        %v975 = vpop.xlane.xlu0 %974
        %v976 = vadd.f32 %v971, %v975
        %vm977 = vcmask 3072
        %978 = vst.msk [vmem:[%s15] sm:$0xf] %vm977, %v976
        %v979 = vld [vmem:[%s16] sm:$0xf]
        %v980 = vmul.f32 %v970, %v969
        %v981 = vsel %vm972, %v980, 0.0
        %982 = vadd.xlane.f32.xlu0 %v981
        %v983 = vpop.xlane.xlu0 %982
        %v984 = vadd.f32 %v979, %v983
        %985 = vst.msk [vmem:[%s16] sm:$0xf] %vm977, %v984
      $region80: #{network_forward.2} parent=63 // pred_fallthru
        _
      // Predicated region
      $region81: #{network_forward.2} parent=63 // pred_check
        %p986 = pneg %p289
      $region82: #{network_forward.2} parent=63 // pred_check_branch
        %988 = sbr.rel (%p986) target = $region84
      $region83: #{network_forward.2} parent=63 // pred_region
        _
      $region84: #{network_forward.2} parent=63 // pred_fallthru
        _
      // Predicated region
      $region85: #{network_forward.2} parent=63 // pred_check
        %p989 = pneg %p310
      $region86: #{network_forward.2} parent=63 // pred_check_branch
        %991 = sbr.rel (%p989) target = $region88
      $region87: #{network_forward.2} parent=63 // pred_region
        _
      $region88: #{network_forward.2} parent=63 // pred_fallthru
        _
      // Predicated region
      $region89: #{network_forward.2} parent=63 // pred_check
        %p992 = pneg %p331
      $region90: #{network_forward.2} parent=63 // pred_check_branch
        %994 = sbr.rel (%p992) target = $region92
      $region91: #{network_forward.2} parent=63 // pred_region
        _
      $region92: #{network_forward.2} parent=63 // pred_fallthru
        _
      // Predicated region
      $region93: #{network_forward.2} parent=63 // pred_check
        %p995 = pneg %p352
      $region94: #{network_forward.2} parent=63 // pred_check_branch
        %997 = sbr.rel (%p995) target = $region96
      $region95: #{network_forward.2} parent=63 // pred_region
        _
      $region96: #{network_forward.2} parent=63 // pred_fallthru
        _
      // Predicated region
      $region97: #{network_forward.2} parent=63 // pred_check
        %p998 = pneg %p373
      $region98: #{network_forward.2} parent=63 // pred_check_branch
        %1000 = sbr.rel (%p998) target = $region100
      $region99: #{network_forward.2} parent=63 // pred_region
        _
      $region100: #{network_forward.2} parent=63 // pred_fallthru
        _
      // Predicated region
      $region101: #{network_forward.2} parent=63 // pred_check
        %p1001 = pneg %p394
      $region102: #{network_forward.2} parent=63 // pred_check_branch
        %1003 = sbr.rel (%p1001) target = $region104
      $region103: #{network_forward.2} parent=63 // pred_region
        _
      $region104: #{network_forward.2} parent=63 // pred_fallthru
        _
      // Predicated region
      $region105: #{network_forward.2} parent=63 // pred_check
        %p1004 = pneg %p289
      $region106: #{network_forward.2} parent=63 // pred_check_branch
        %1006 = sbr.rel (%p1004) target = $region108
      $region107: #{network_forward.2} parent=63 // pred_region
        _
      $region108: #{network_forward.2} parent=63 // pred_fallthru
        _
      // Predicated region
      $region109: #{network_forward.2} parent=63 // pred_check
        %p1007 = pneg %p310
      $region110: #{network_forward.2} parent=63 // pred_check_branch
        %1009 = sbr.rel (%p1007) target = $region112
      $region111: #{network_forward.2} parent=63 // pred_region
        _
      $region112: #{network_forward.2} parent=63 // pred_fallthru
        _
      // Predicated region
      $region113: #{network_forward.2} parent=63 // pred_check
        %p1010 = pneg %p331
      $region114: #{network_forward.2} parent=63 // pred_check_branch
        %1012 = sbr.rel (%p1010) target = $region116
      $region115: #{network_forward.2} parent=63 // pred_region
        _
      $region116: #{network_forward.2} parent=63 // pred_fallthru
        _
      // Predicated region
      $region117: #{network_forward.2} parent=63 // pred_check
        %p1013 = pneg %p352
      $region118: #{network_forward.2} parent=63 // pred_check_branch
        %1015 = sbr.rel (%p1013) target = $region120
      $region119: #{network_forward.2} parent=63 // pred_region
        _
      $region120: #{network_forward.2} parent=63 // pred_fallthru
        _
      // Predicated region
      $region121: #{network_forward.2} parent=63 // pred_check
        %p1016 = pneg %p373
      $region122: #{network_forward.2} parent=63 // pred_check_branch
        %1018 = sbr.rel (%p1016) target = $region124
      $region123: #{network_forward.2} parent=63 // pred_region
        _
      $region124: #{network_forward.2} parent=63 // pred_fallthru
        _
      // Predicated region
      $region125: #{network_forward.2} parent=63 // pred_check
        %p1019 = pneg %p394
      $region126: #{network_forward.2} parent=63 // pred_check_branch
        %1021 = sbr.rel (%p1019) target = $region128
      $region127: #{network_forward.2} parent=63 // pred_region
        _
      $region128: #{network_forward.2} parent=63 // pred_fallthru
        _
    $region64: #{network_forward.2} parent=5 // pred_fallthru
      _
    %p1022 = scmp.le.s32.totalorder 2, %s23
    // Predicated region
    $region129: #{network_forward.2} parent=5 // pred_check
      %p1023 = pneg %p1022
    $region130: #{network_forward.2} parent=5 // pred_check_branch
      %1025 = sbr.rel (%p1023) target = $region132
    $region131: #{network_forward.2} parent=5 // pred_region
      %s1026 = ssub.s32 %s23, 2
    $region132: #{network_forward.2} parent=5 // pred_fallthru
      _
  $region6: #{network_forward.2} parent=0 // loop_footer
    %s27 = sadd.s32 1, %s23
  $region7: #{network_forward.2} parent=0 // loop_footer_branch
    %22 = sbr.rel target = $region3
  $region8: #{network_forward.2} parent=0 // loop_exit
    _

</llo_original>
